<compile_context>
chip_gen: v7x
topology: tpu7x:2x2x1
jax: 0.10.0
libtpu: 0.0.40
codegen_flags: <defaults>
</compile_context>

<pallas_src>
import jax
import jax.numpy as jnp
import numpy as np
from jax.experimental import pallas as pl
from jax.experimental.pallas import tpu as pltpu

BN_EPS = 1e-5
LANE_PAD = 128          # lane-dense output width
NEG_PAD = -1e30         # bias for padded logit columns (exp underflows to 0)
SUBLANE_PACK = 16       # bf16 sublane packing: keep slab row offsets multiples of 16


def _round_up(x, m):
    return (x + m - 1) // m * m


def make_gin_kernel(dim_h, fan_ins_pad, w_offsets):
    """Kernel closure with static layer offsets into the bf16 weight slab."""

    def mlp(h_agg, w_ref, v_ref, layer):
        w1_start, w2_start = w_offsets[layer]
        fan_in_pad = fan_ins_pad[layer]
        base = 4 * layer
        b1 = v_ref[base + 0:base + 1, :dim_h]
        gamma = v_ref[base + 1:base + 2, :dim_h]
        beta = v_ref[base + 2:base + 3, :dim_h]
        b2 = v_ref[base + 3:base + 4, :dim_h]

        # Linear 1 (bf16 operands, f32 accumulation). Full padded row extent:
        # zero pad rows x zero pad lanes contribute nothing, slice stays aligned.
        z = jnp.dot(h_agg.astype(jnp.bfloat16),
                    w_ref[w1_start:w1_start + fan_in_pad, :],
                    preferred_element_type=jnp.float32) + b1

        # BatchNorm1d (train-mode batch stats, biased var) fused to scale/shift.
        # One-pass moments in f32; clamp var >= 0 against cancellation.
        n_inv = 1.0 / z.shape[0]
        s1 = jnp.sum(z, axis=0, keepdims=True)
        s2 = jnp.sum(z * z, axis=0, keepdims=True)
        mean = s1 * n_inv
        var = jnp.maximum(s2 * n_inv - mean * mean, 0.0)
        scale = gamma * jax.lax.rsqrt(var + BN_EPS)
        shift = beta - mean * scale
        z = jnp.maximum(z * scale + shift, 0.0)

        # Linear 2 + ReLU (bf16 operands, f32 accumulation).
        z = jnp.dot(z.astype(jnp.bfloat16),
                    w_ref[w2_start:w2_start + dim_h, :],
                    preferred_element_type=jnp.float32) + b2
        return jnp.maximum(z, 0.0)

    def kernel(x_ref, ahat_ref, w_ref, wl_ref, v_ref, out_ref):
        a_hat = ahat_ref[...]                                   # (N, N) bf16 = I + A

        agg1 = jnp.dot(a_hat, x_ref[...], preferred_element_type=jnp.float32)
        h1 = mlp(agg1, w_ref, v_ref, 0)
        h1b = h1.astype(jnp.bfloat16)
        agg2 = jnp.dot(a_hat, h1b, preferred_element_type=jnp.float32)
        h2 = mlp(agg2, w_ref, v_ref, 1)
        h2b = h2.astype(jnp.bfloat16)
        agg3 = jnp.dot(a_hat, h2b, preferred_element_type=jnp.float32)
        h3b = mlp(agg3, w_ref, v_ref, 2).astype(jnp.bfloat16)

        # Concat-free readout: three matmuls against aligned row slices of the
        # lane-padded final weight. Padded columns get bias NEG_PAD (f32).
        bl = v_ref[12:13, :]                                    # (1, 128) f32
        logits = (jnp.dot(h1b, wl_ref[0 * dim_h:1 * dim_h, :],
                          preferred_element_type=jnp.float32)
                  + jnp.dot(h2b, wl_ref[1 * dim_h:2 * dim_h, :],
                            preferred_element_type=jnp.float32)
                  + jnp.dot(h3b, wl_ref[2 * dim_h:3 * dim_h, :],
                            preferred_element_type=jnp.float32)
                  + bl)

        # log_softmax over the 128-lane padded dim in f32; padded columns carry
        # bias -1e30 so exp() underflows to 0 and real columns are exact.
        m = jnp.max(logits, axis=1, keepdims=True)
        shifted = logits - m
        lse = jnp.log(jnp.sum(jnp.exp(shifted), axis=1, keepdims=True))
        out_ref[...] = shifted - lse

    return kernel


def gin_forward(x, a_hat, packed, dim_in, dim_h, w_offsets, *, vmem_limit_bytes=None):
    """Batched forward: grid=(num_graphs,), one graph per step, weights resident.

    Returns the lane-padded (B, N, 128) log-prob slab; consumers should slice
    [..., :dim_out] (or fuse argmax/loss) to avoid an extra Nx128 HBM pass here.
    For much larger N, additionally tile a_hat with a (row, col) grid (col =
    trailing 'arbitrary' reduction axis + VMEM agg accumulator) while keeping
    the N x dim_h activations resident for full-batch BN stats; raise
    vmem_limit_bytes on v5e/v6e (128 MiB parts) to keep a_hat fully resident
    up to N~4-5K, halve that budget on v7x (64 MiB VMEM).
    """
    b, n, _ = x.shape
    w_slab, wl_pad, v_all = packed
    din_pad = _round_up(dim_in, SUBLANE_PACK)
    fan_ins_pad = (din_pad, dim_h, dim_h)

    # bf16 MXU operands (a_hat degrees are small exact ints -> exact in bf16).
    x_pad = jnp.zeros((b, n, din_pad), jnp.bfloat16).at[:, :, :dim_in].set(
        x.astype(jnp.bfloat16))
    a_hat_b = a_hat.astype(jnp.bfloat16)

    kernel = make_gin_kernel(dim_h, fan_ins_pad, w_offsets)

    flops = b * (2 * n * n * din_pad + 4 * n * n * dim_h            # aggregations
                 + 2 * n * din_pad * dim_h + 10 * n * dim_h * dim_h  # MLP linears
                 + 6 * n * dim_h * LANE_PAD)                         # readout
    bytes_accessed = int(a_hat_b.size * 2 + x_pad.size * 2
                         + w_slab.size * 2 + wl_pad.size * 2 + v_all.size * 4
                         + b * n * LANE_PAD * 4)
    transcendentals = b * (n * LANE_PAD + n + 6 * dim_h)

    out_pad = pl.pallas_call(
        kernel,
        out_shape=jax.ShapeDtypeStruct((b, n, LANE_PAD), jnp.float32),
        grid=(b,),
        in_specs=[
            pl.BlockSpec((None, n, din_pad), lambda g: (g, 0, 0)),
            pl.BlockSpec((None, n, n), lambda g: (g, 0, 0)),
            pl.BlockSpec(w_slab.shape, lambda g: (0, 0)),   # shared, stays resident
            pl.BlockSpec(wl_pad.shape, lambda g: (0, 0)),
            pl.BlockSpec(v_all.shape, lambda g: (0, 0)),
        ],
        out_specs=pl.BlockSpec((None, n, LANE_PAD), lambda g: (g, 0, 0)),
        compiler_params=pltpu.CompilerParams(
            dimension_semantics=("parallel",),
            vmem_limit_bytes=vmem_limit_bytes),
        cost_estimate=pl.CostEstimate(flops=flops,
                                      transcendentals=transcendentals,
                                      bytes_accessed=bytes_accessed),
    )(x_pad, a_hat_b, w_slab, wl_pad, v_all)
    return out_pad


# ---------------------------------------------------------------------------
# Parameter init / packing / pure-JAX reference
# ---------------------------------------------------------------------------

def init_linear(key, fan_in, fan_out):
    """PyTorch-style uniform(-1/sqrt(fan_in), 1/sqrt(fan_in)); weight stored (fan_in, fan_out)."""
    kw, kb = jax.random.split(key)
    bound = 1.0 / np.sqrt(fan_in)
    w = jax.random.uniform(kw, (fan_in, fan_out), jnp.float32, -bound, bound)
    b = jax.random.uniform(kb, (1, fan_out), jnp.float32, -bound, bound)
    return w, b


def init_gin_params(key, dim_in, dim_h, dim_out):
    keys = jax.random.split(key, 8)
    params = []
    d_prev = dim_in
    for i in range(3):  # conv1..conv3 MLPs
        w1, b1 = init_linear(keys[2 * i], d_prev, dim_h)
        w2, b2 = init_linear(keys[2 * i + 1], dim_h, dim_h)
        gamma = jnp.ones((1, dim_h), jnp.float32)
        beta = jnp.zeros((1, dim_h), jnp.float32)
        params += [w1, b1, gamma, beta, w2, b2]
        d_prev = dim_h
    wl, bl = init_linear(keys[6], dim_h * 3, dim_out)
    params += [wl, bl]
    return params


def pack_params(params, dim_in, dim_h, dim_out):
    """Pack the 20 small tensors into 3 slabs (bf16 weights, bf16 readout, f32 vectors)."""
    w_rows, v_rows, offsets = [], [], []
    row = 0
    for l in range(3):
        w1, b1, gamma, beta, w2, b2 = params[6 * l:6 * l + 6]
        fan_in = w1.shape[0]
        fan_in_pad = _round_up(fan_in, SUBLANE_PACK)
        w1p = jnp.zeros((fan_in_pad, dim_h), jnp.float32).at[:fan_in].set(w1)
        offsets.append((row, row + fan_in_pad))
        row += fan_in_pad + dim_h          # dim_h multiple of 16 keeps bf16 offsets aligned
        w_rows += [w1p, w2]
        v_rows += [b1, gamma, beta, b2]    # each (1, dim_h)
    w_slab = jnp.concatenate(w_rows, axis=0).astype(jnp.bfloat16)

    wl, bl = params[18], params[19]
    wl_pad = (jnp.zeros((3 * dim_h, LANE_PAD), jnp.float32)
              .at[:, :dim_out].set(wl).astype(jnp.bfloat16))

    # f32 vector slab: rows 0..11 = b1/gamma/beta/b2 per layer (lanes :dim_h),
    # row 12 = final bias lane-padded with NEG_PAD, rows 13..15 zero.
    v_all = jnp.zeros((16, LANE_PAD), jnp.float32)
    v_all = v_all.at[:12, :dim_h].set(jnp.concatenate(v_rows, axis=0))
    v_all = v_all.at[12, :].set(NEG_PAD)
    v_all = v_all.at[12, :dim_out].set(bl[0])
    return (w_slab, wl_pad, v_all), tuple(offsets)


def reference_forward(x, a_hat, params, mxu_dtype=jnp.float32):
    """Pure-JAX reference of the PyTorch module math (single graph).

    mxu_dtype=jnp.bfloat16 mirrors the kernel's MXU operand dtype (the only
    intentional deviation from f32); mxu_dtype=jnp.float32 is the exact f32
    module math, used as a coarser sanity bound.
    """
    def mm(a, b):
        return jnp.dot(a.astype(mxu_dtype), b.astype(mxu_dtype),
                       preferred_element_type=jnp.float32)

    def mlp(h, w1, b1, g, be, w2, b2):
        z = mm(h, w1) + b1
        mean = jnp.mean(z, axis=0, keepdims=True)
        var = jnp.mean((z - mean) ** 2, axis=0, keepdims=True)   # biased, train-mode BN
        z = (z - mean) / jnp.sqrt(var + BN_EPS) * g + be
        z = jnp.maximum(z, 0.0)
        return jnp.maximum(mm(z, w2) + b2, 0.0)

    p = params
    h1 = mlp(mm(a_hat, x), *p[0:6])
    h2 = mlp(mm(a_hat, h1), *p[6:12])
    h3 = mlp(mm(a_hat, h2), *p[12:18])
    h = jnp.concatenate([h1, h2, h3], axis=1)
    logits = mm(h, p[18]) + p[19]
    return jax.nn.log_softmax(logits, axis=1)


if __name__ == "__main__":
    key = jax.random.PRNGKey(0)
    k_x, k_e, k_p = jax.random.split(key, 3)

    B, N, E = 8, 64, 256                  # graphs per call, nodes, edges per graph
    DIM_IN, DIM_H, DIM_OUT = 16, 32, 8

    x = jax.random.normal(k_x, (B, N, DIM_IN), jnp.float32)
    edge_index = jax.random.randint(k_e, (B, 2, E), 0, N)   # per graph: row0=src, row1=dst

    # Dense aggregation operator: A[dst, src] += 1 ; A_hat = I + A  (eps = 0)
    # TODO(synk): edge_index scatter-add is built in JAX glue; a Pallas gather/
    # scatter DMA path is only worthwhile for much larger sparse graphs.
    def build_a_hat(ei):
        src, dst = ei[0], ei[1]
        A = jnp.zeros((N, N), jnp.float32).at[dst, src].add(1.0)
        return A + jnp.eye(N, dtype=jnp.float32)

    a_hat = jax.vmap(build_a_hat)(edge_index)               # (B, N, N)

    params = init_gin_params(k_p, DIM_IN, DIM_H, DIM_OUT)
    packed, w_offsets = pack_params(params, DIM_IN, DIM_H, DIM_OUT)

    out_pad = gin_forward(x, a_hat, packed, DIM_IN, DIM_H, w_offsets)
    out_pad = jax.block_until_ready(out_pad)
    out = np.asarray(out_pad)[:, :, :DIM_OUT]               # slice away padded lanes (test only)

    # Tight check against a reference that mirrors the kernel's bf16 MXU operands.
    ref_bf16 = jax.vmap(lambda xx, aa: reference_forward(xx, aa, params, jnp.bfloat16))(x, a_hat)
    np.testing.assert_allclose(out, np.asarray(ref_bf16), atol=2e-3, rtol=2e-3)

    # Coarser sanity bound against the exact f32 module math (bf16 operand rounding).
    ref_f32 = jax.vmap(lambda xx, aa: reference_forward(xx, aa, params, jnp.float32))(x, a_hat)
    np.testing.assert_allclose(out, np.asarray(ref_f32), atol=1e-1, rtol=1e-1)

    print("KERNEL_OK")
</pallas_src>

<mosaic_0001>
module attributes {stable_mosaic.version = 11 : i64} {
  func.func @kernel(%arg0: i32, %arg1: memref<1x64x16xbf16, #tpu.memory_space<vmem>>, %arg2: memref<1x64x64xbf16, #tpu.memory_space<vmem>>, %arg3: memref<176x32xbf16, #tpu.memory_space<vmem>>, %arg4: memref<96x128xbf16, #tpu.memory_space<vmem>>, %arg5: memref<16x128xf32, #tpu.memory_space<vmem>>, %arg6: memref<1x64x128xf32, #tpu.memory_space<vmem>>) attributes {dimension_semantics = [#tpu.dimension_semantics<parallel>], iteration_bounds = array<i64: 8>, scalar_prefetch = 0 : i64, scratch_operands = 0 : i64, tpu.core_type = #tpu.core_type<tc>, window_params = [{transform_indices = @transform_0, window_bounds = array<i64: 1, 64, 16>}, {transform_indices = @transform_1, window_bounds = array<i64: 1, 64, 64>}, {pipeline_mode = #tpu.pipeline_mode<synchronous>, transform_indices = @transform_2, window_bounds = array<i64: 176, 32>}, {pipeline_mode = #tpu.pipeline_mode<synchronous>, transform_indices = @transform_3, window_bounds = array<i64: 96, 128>}, {pipeline_mode = #tpu.pipeline_mode<synchronous>, transform_indices = @transform_4, window_bounds = array<i64: 16, 128>}, {transform_indices = @transform_5, window_bounds = array<i64: 1, 64, 128>}]} {
    %c0 = arith.constant 0 : index
    %c0_0 = arith.constant 0 : index
    %c0_1 = arith.constant 0 : index
    %0 = vector.load %arg2[%c0, %c0_0, %c0_1] : memref<1x64x64xbf16, #tpu.memory_space<vmem>>, vector<1x64x64xbf16>
    %1 = vector.shape_cast %0 : vector<1x64x64xbf16> to vector<64x64xbf16>
    %c0_2 = arith.constant 0 : index
    %c0_3 = arith.constant 0 : index
    %c0_4 = arith.constant 0 : index
    %2 = vector.load %arg1[%c0_2, %c0_3, %c0_4] : memref<1x64x16xbf16, #tpu.memory_space<vmem>>, vector<1x64x16xbf16>
    %3 = vector.shape_cast %2 : vector<1x64x16xbf16> to vector<64x16xbf16>
    %cst = arith.constant dense<0.000000e+00> : vector<64x16xf32>
    %4 = tpu.matmul %1, %3, %cst {dimension_numbers = #tpu.dot_dimension_numbers<[1], [0], [0], [1], [0, 0, 1, 1], [], []>} : vector<64x64xbf16>, vector<64x16xbf16>, vector<64x16xf32> -> vector<64x16xf32>
    %c0_5 = arith.constant 0 : index
    %c0_6 = arith.constant 0 : index
    %5 = vector.load %arg5[%c0_5, %c0_6] : memref<16x128xf32, #tpu.memory_space<vmem>>, vector<1x32xf32>
    %c1 = arith.constant 1 : index
    %c0_7 = arith.constant 0 : index
    %6 = vector.load %arg5[%c1, %c0_7] : memref<16x128xf32, #tpu.memory_space<vmem>>, vector<1x32xf32>
    %c2 = arith.constant 2 : index
    %c0_8 = arith.constant 0 : index
    %7 = vector.load %arg5[%c2, %c0_8] : memref<16x128xf32, #tpu.memory_space<vmem>>, vector<1x32xf32>
    %c3 = arith.constant 3 : index
    %c0_9 = arith.constant 0 : index
    %8 = vector.load %arg5[%c3, %c0_9] : memref<16x128xf32, #tpu.memory_space<vmem>>, vector<1x32xf32>
    %9 = arith.truncf %4 : vector<64x16xf32> to vector<64x16xbf16>
    %c0_10 = arith.constant 0 : index
    %c0_11 = arith.constant 0 : index
    %10 = vector.load %arg3[%c0_10, %c0_11] : memref<176x32xbf16, #tpu.memory_space<vmem>>, vector<16x32xbf16>
    %cst_12 = arith.constant dense<0.000000e+00> : vector<64x32xf32>
    %11 = tpu.matmul %9, %10, %cst_12 {dimension_numbers = #tpu.dot_dimension_numbers<[1], [0], [0], [1], [0, 0, 1, 1], [], []>} : vector<64x16xbf16>, vector<16x32xbf16>, vector<64x32xf32> -> vector<64x32xf32>
    %12 = vector.broadcast %5 : vector<1x32xf32> to vector<64x32xf32>
    %13 = arith.addf %11, %12 : vector<64x32xf32>
    %cst_13 = arith.constant dense<0.000000e+00> : vector<32xf32>
    %14 = vector.multi_reduction <add>, %13, %cst_13 [0] : vector<64x32xf32> to vector<32xf32>
    %15 = vector.shape_cast %14 : vector<32xf32> to vector<1x32xf32>
    %16 = arith.mulf %13, %13 : vector<64x32xf32>
    %cst_14 = arith.constant dense<0.000000e+00> : vector<32xf32>
    %17 = vector.multi_reduction <add>, %16, %cst_14 [0] : vector<64x32xf32> to vector<32xf32>
    %18 = vector.shape_cast %17 : vector<32xf32> to vector<1x32xf32>
    %cst_15 = arith.constant 1.562500e-02 : f32
    %19 = vector.broadcast %cst_15 : f32 to vector<1x32xf32>
    %20 = arith.mulf %15, %19 : vector<1x32xf32>
    %cst_16 = arith.constant 1.562500e-02 : f32
    %21 = vector.broadcast %cst_16 : f32 to vector<1x32xf32>
    %22 = arith.mulf %18, %21 : vector<1x32xf32>
    %23 = arith.mulf %20, %20 : vector<1x32xf32>
    %24 = arith.subf %22, %23 : vector<1x32xf32>
    %cst_17 = arith.constant 0.000000e+00 : f32
    %25 = vector.broadcast %cst_17 : f32 to vector<1x32xf32>
    %26 = arith.maximumf %24, %25 : vector<1x32xf32>
    %cst_18 = arith.constant 9.99999974E-6 : f32
    %27 = vector.broadcast %cst_18 : f32 to vector<1x32xf32>
    %28 = arith.addf %26, %27 : vector<1x32xf32>
    %29 = math.rsqrt %28 : vector<1x32xf32>
    %30 = arith.mulf %6, %29 : vector<1x32xf32>
    %31 = arith.mulf %20, %30 : vector<1x32xf32>
    %32 = arith.subf %7, %31 : vector<1x32xf32>
    %33 = vector.broadcast %30 : vector<1x32xf32> to vector<64x32xf32>
    %34 = arith.mulf %13, %33 : vector<64x32xf32>
    %35 = vector.broadcast %32 : vector<1x32xf32> to vector<64x32xf32>
    %36 = arith.addf %34, %35 : vector<64x32xf32>
    %cst_19 = arith.constant 0.000000e+00 : f32
    %37 = vector.broadcast %cst_19 : f32 to vector<64x32xf32>
    %38 = arith.maximumf %36, %37 : vector<64x32xf32>
    %39 = arith.truncf %38 : vector<64x32xf32> to vector<64x32xbf16>
    %c16 = arith.constant 16 : index
    %c0_20 = arith.constant 0 : index
    %40 = vector.load %arg3[%c16, %c0_20] : memref<176x32xbf16, #tpu.memory_space<vmem>>, vector<32x32xbf16>
    %cst_21 = arith.constant dense<0.000000e+00> : vector<64x32xf32>
    %41 = tpu.matmul %39, %40, %cst_21 {dimension_numbers = #tpu.dot_dimension_numbers<[1], [0], [0], [1], [0, 0, 1, 1], [], []>} : vector<64x32xbf16>, vector<32x32xbf16>, vector<64x32xf32> -> vector<64x32xf32>
    %42 = vector.broadcast %8 : vector<1x32xf32> to vector<64x32xf32>
    %43 = arith.addf %41, %42 : vector<64x32xf32>
    %cst_22 = arith.constant 0.000000e+00 : f32
    %44 = vector.broadcast %cst_22 : f32 to vector<64x32xf32>
    %45 = arith.maximumf %43, %44 : vector<64x32xf32>
    %46 = arith.truncf %45 : vector<64x32xf32> to vector<64x32xbf16>
    %cst_23 = arith.constant dense<0.000000e+00> : vector<64x32xf32>
    %47 = tpu.matmul %1, %46, %cst_23 {dimension_numbers = #tpu.dot_dimension_numbers<[1], [0], [0], [1], [0, 0, 1, 1], [], []>} : vector<64x64xbf16>, vector<64x32xbf16>, vector<64x32xf32> -> vector<64x32xf32>
    %c4 = arith.constant 4 : index
    %c0_24 = arith.constant 0 : index
    %48 = vector.load %arg5[%c4, %c0_24] : memref<16x128xf32, #tpu.memory_space<vmem>>, vector<1x32xf32>
    %c5 = arith.constant 5 : index
    %c0_25 = arith.constant 0 : index
    %49 = vector.load %arg5[%c5, %c0_25] : memref<16x128xf32, #tpu.memory_space<vmem>>, vector<1x32xf32>
    %c6 = arith.constant 6 : index
    %c0_26 = arith.constant 0 : index
    %50 = vector.load %arg5[%c6, %c0_26] : memref<16x128xf32, #tpu.memory_space<vmem>>, vector<1x32xf32>
    %c7 = arith.constant 7 : index
    %c0_27 = arith.constant 0 : index
    %51 = vector.load %arg5[%c7, %c0_27] : memref<16x128xf32, #tpu.memory_space<vmem>>, vector<1x32xf32>
    %52 = arith.truncf %47 : vector<64x32xf32> to vector<64x32xbf16>
    %c48 = arith.constant 48 : index
    %c0_28 = arith.constant 0 : index
    %53 = vector.load %arg3[%c48, %c0_28] : memref<176x32xbf16, #tpu.memory_space<vmem>>, vector<32x32xbf16>
    %cst_29 = arith.constant dense<0.000000e+00> : vector<64x32xf32>
    %54 = tpu.matmul %52, %53, %cst_29 {dimension_numbers = #tpu.dot_dimension_numbers<[1], [0], [0], [1], [0, 0, 1, 1], [], []>} : vector<64x32xbf16>, vector<32x32xbf16>, vector<64x32xf32> -> vector<64x32xf32>
    %55 = vector.broadcast %48 : vector<1x32xf32> to vector<64x32xf32>
    %56 = arith.addf %54, %55 : vector<64x32xf32>
    %cst_30 = arith.constant dense<0.000000e+00> : vector<32xf32>
    %57 = vector.multi_reduction <add>, %56, %cst_30 [0] : vector<64x32xf32> to vector<32xf32>
    %58 = vector.shape_cast %57 : vector<32xf32> to vector<1x32xf32>
    %59 = arith.mulf %56, %56 : vector<64x32xf32>
    %cst_31 = arith.constant dense<0.000000e+00> : vector<32xf32>
    %60 = vector.multi_reduction <add>, %59, %cst_31 [0] : vector<64x32xf32> to vector<32xf32>
    %61 = vector.shape_cast %60 : vector<32xf32> to vector<1x32xf32>
    %cst_32 = arith.constant 1.562500e-02 : f32
    %62 = vector.broadcast %cst_32 : f32 to vector<1x32xf32>
    %63 = arith.mulf %58, %62 : vector<1x32xf32>
    %cst_33 = arith.constant 1.562500e-02 : f32
    %64 = vector.broadcast %cst_33 : f32 to vector<1x32xf32>
    %65 = arith.mulf %61, %64 : vector<1x32xf32>
    %66 = arith.mulf %63, %63 : vector<1x32xf32>
    %67 = arith.subf %65, %66 : vector<1x32xf32>
    %cst_34 = arith.constant 0.000000e+00 : f32
    %68 = vector.broadcast %cst_34 : f32 to vector<1x32xf32>
    %69 = arith.maximumf %67, %68 : vector<1x32xf32>
    %cst_35 = arith.constant 9.99999974E-6 : f32
    %70 = vector.broadcast %cst_35 : f32 to vector<1x32xf32>
    %71 = arith.addf %69, %70 : vector<1x32xf32>
    %72 = math.rsqrt %71 : vector<1x32xf32>
    %73 = arith.mulf %49, %72 : vector<1x32xf32>
    %74 = arith.mulf %63, %73 : vector<1x32xf32>
    %75 = arith.subf %50, %74 : vector<1x32xf32>
    %76 = vector.broadcast %73 : vector<1x32xf32> to vector<64x32xf32>
    %77 = arith.mulf %56, %76 : vector<64x32xf32>
    %78 = vector.broadcast %75 : vector<1x32xf32> to vector<64x32xf32>
    %79 = arith.addf %77, %78 : vector<64x32xf32>
    %cst_36 = arith.constant 0.000000e+00 : f32
    %80 = vector.broadcast %cst_36 : f32 to vector<64x32xf32>
    %81 = arith.maximumf %79, %80 : vector<64x32xf32>
    %82 = arith.truncf %81 : vector<64x32xf32> to vector<64x32xbf16>
    %c80 = arith.constant 80 : index
    %c0_37 = arith.constant 0 : index
    %83 = vector.load %arg3[%c80, %c0_37] : memref<176x32xbf16, #tpu.memory_space<vmem>>, vector<32x32xbf16>
    %cst_38 = arith.constant dense<0.000000e+00> : vector<64x32xf32>
    %84 = tpu.matmul %82, %83, %cst_38 {dimension_numbers = #tpu.dot_dimension_numbers<[1], [0], [0], [1], [0, 0, 1, 1], [], []>} : vector<64x32xbf16>, vector<32x32xbf16>, vector<64x32xf32> -> vector<64x32xf32>
    %85 = vector.broadcast %51 : vector<1x32xf32> to vector<64x32xf32>
    %86 = arith.addf %84, %85 : vector<64x32xf32>
    %cst_39 = arith.constant 0.000000e+00 : f32
    %87 = vector.broadcast %cst_39 : f32 to vector<64x32xf32>
    %88 = arith.maximumf %86, %87 : vector<64x32xf32>
    %89 = arith.truncf %88 : vector<64x32xf32> to vector<64x32xbf16>
    %cst_40 = arith.constant dense<0.000000e+00> : vector<64x32xf32>
    %90 = tpu.matmul %1, %89, %cst_40 {dimension_numbers = #tpu.dot_dimension_numbers<[1], [0], [0], [1], [0, 0, 1, 1], [], []>} : vector<64x64xbf16>, vector<64x32xbf16>, vector<64x32xf32> -> vector<64x32xf32>
    %c8 = arith.constant 8 : index
    %c0_41 = arith.constant 0 : index
    %91 = vector.load %arg5[%c8, %c0_41] : memref<16x128xf32, #tpu.memory_space<vmem>>, vector<1x32xf32>
    %c9 = arith.constant 9 : index
    %c0_42 = arith.constant 0 : index
    %92 = vector.load %arg5[%c9, %c0_42] : memref<16x128xf32, #tpu.memory_space<vmem>>, vector<1x32xf32>
    %c10 = arith.constant 10 : index
    %c0_43 = arith.constant 0 : index
    %93 = vector.load %arg5[%c10, %c0_43] : memref<16x128xf32, #tpu.memory_space<vmem>>, vector<1x32xf32>
    %c11 = arith.constant 11 : index
    %c0_44 = arith.constant 0 : index
    %94 = vector.load %arg5[%c11, %c0_44] : memref<16x128xf32, #tpu.memory_space<vmem>>, vector<1x32xf32>
    %95 = arith.truncf %90 : vector<64x32xf32> to vector<64x32xbf16>
    %c112 = arith.constant 112 : index
    %c0_45 = arith.constant 0 : index
    %96 = vector.load %arg3[%c112, %c0_45] : memref<176x32xbf16, #tpu.memory_space<vmem>>, vector<32x32xbf16>
    %cst_46 = arith.constant dense<0.000000e+00> : vector<64x32xf32>
    %97 = tpu.matmul %95, %96, %cst_46 {dimension_numbers = #tpu.dot_dimension_numbers<[1], [0], [0], [1], [0, 0, 1, 1], [], []>} : vector<64x32xbf16>, vector<32x32xbf16>, vector<64x32xf32> -> vector<64x32xf32>
    %98 = vector.broadcast %91 : vector<1x32xf32> to vector<64x32xf32>
    %99 = arith.addf %97, %98 : vector<64x32xf32>
    %cst_47 = arith.constant dense<0.000000e+00> : vector<32xf32>
    %100 = vector.multi_reduction <add>, %99, %cst_47 [0] : vector<64x32xf32> to vector<32xf32>
    %101 = vector.shape_cast %100 : vector<32xf32> to vector<1x32xf32>
    %102 = arith.mulf %99, %99 : vector<64x32xf32>
    %cst_48 = arith.constant dense<0.000000e+00> : vector<32xf32>
    %103 = vector.multi_reduction <add>, %102, %cst_48 [0] : vector<64x32xf32> to vector<32xf32>
    %104 = vector.shape_cast %103 : vector<32xf32> to vector<1x32xf32>
    %cst_49 = arith.constant 1.562500e-02 : f32
    %105 = vector.broadcast %cst_49 : f32 to vector<1x32xf32>
    %106 = arith.mulf %101, %105 : vector<1x32xf32>
    %cst_50 = arith.constant 1.562500e-02 : f32
    %107 = vector.broadcast %cst_50 : f32 to vector<1x32xf32>
    %108 = arith.mulf %104, %107 : vector<1x32xf32>
    %109 = arith.mulf %106, %106 : vector<1x32xf32>
    %110 = arith.subf %108, %109 : vector<1x32xf32>
    %cst_51 = arith.constant 0.000000e+00 : f32
    %111 = vector.broadcast %cst_51 : f32 to vector<1x32xf32>
    %112 = arith.maximumf %110, %111 : vector<1x32xf32>
    %cst_52 = arith.constant 9.99999974E-6 : f32
    %113 = vector.broadcast %cst_52 : f32 to vector<1x32xf32>
    %114 = arith.addf %112, %113 : vector<1x32xf32>
    %115 = math.rsqrt %114 : vector<1x32xf32>
    %116 = arith.mulf %92, %115 : vector<1x32xf32>
    %117 = arith.mulf %106, %116 : vector<1x32xf32>
    %118 = arith.subf %93, %117 : vector<1x32xf32>
    %119 = vector.broadcast %116 : vector<1x32xf32> to vector<64x32xf32>
    %120 = arith.mulf %99, %119 : vector<64x32xf32>
    %121 = vector.broadcast %118 : vector<1x32xf32> to vector<64x32xf32>
    %122 = arith.addf %120, %121 : vector<64x32xf32>
    %cst_53 = arith.constant 0.000000e+00 : f32
    %123 = vector.broadcast %cst_53 : f32 to vector<64x32xf32>
    %124 = arith.maximumf %122, %123 : vector<64x32xf32>
    %125 = arith.truncf %124 : vector<64x32xf32> to vector<64x32xbf16>
    %c144 = arith.constant 144 : index
    %c0_54 = arith.constant 0 : index
    %126 = vector.load %arg3[%c144, %c0_54] : memref<176x32xbf16, #tpu.memory_space<vmem>>, vector<32x32xbf16>
    %cst_55 = arith.constant dense<0.000000e+00> : vector<64x32xf32>
    %127 = tpu.matmul %125, %126, %cst_55 {dimension_numbers = #tpu.dot_dimension_numbers<[1], [0], [0], [1], [0, 0, 1, 1], [], []>} : vector<64x32xbf16>, vector<32x32xbf16>, vector<64x32xf32> -> vector<64x32xf32>
    %128 = vector.broadcast %94 : vector<1x32xf32> to vector<64x32xf32>
    %129 = arith.addf %127, %128 : vector<64x32xf32>
    %cst_56 = arith.constant 0.000000e+00 : f32
    %130 = vector.broadcast %cst_56 : f32 to vector<64x32xf32>
    %131 = arith.maximumf %129, %130 : vector<64x32xf32>
    %132 = arith.truncf %131 : vector<64x32xf32> to vector<64x32xbf16>
    %c12 = arith.constant 12 : index
    %c0_57 = arith.constant 0 : index
    %133 = vector.load %arg5[%c12, %c0_57] : memref<16x128xf32, #tpu.memory_space<vmem>>, vector<1x128xf32>
    %c0_58 = arith.constant 0 : index
    %c0_59 = arith.constant 0 : index
    %134 = vector.load %arg4[%c0_58, %c0_59] : memref<96x128xbf16, #tpu.memory_space<vmem>>, vector<32x128xbf16>
    %cst_60 = arith.constant dense<0.000000e+00> : vector<64x128xf32>
    %135 = tpu.matmul %46, %134, %cst_60 {dimension_numbers = #tpu.dot_dimension_numbers<[1], [0], [0], [1], [0, 0, 1, 1], [], []>} : vector<64x32xbf16>, vector<32x128xbf16>, vector<64x128xf32> -> vector<64x128xf32>
    %c32 = arith.constant 32 : index
    %c0_61 = arith.constant 0 : index
    %136 = vector.load %arg4[%c32, %c0_61] : memref<96x128xbf16, #tpu.memory_space<vmem>>, vector<32x128xbf16>
    %cst_62 = arith.constant dense<0.000000e+00> : vector<64x128xf32>
    %137 = tpu.matmul %89, %136, %cst_62 {dimension_numbers = #tpu.dot_dimension_numbers<[1], [0], [0], [1], [0, 0, 1, 1], [], []>} : vector<64x32xbf16>, vector<32x128xbf16>, vector<64x128xf32> -> vector<64x128xf32>
    %138 = arith.addf %135, %137 : vector<64x128xf32>
    %c64 = arith.constant 64 : index
    %c0_63 = arith.constant 0 : index
    %139 = vector.load %arg4[%c64, %c0_63] : memref<96x128xbf16, #tpu.memory_space<vmem>>, vector<32x128xbf16>
    %cst_64 = arith.constant dense<0.000000e+00> : vector<64x128xf32>
    %140 = tpu.matmul %132, %139, %cst_64 {dimension_numbers = #tpu.dot_dimension_numbers<[1], [0], [0], [1], [0, 0, 1, 1], [], []>} : vector<64x32xbf16>, vector<32x128xbf16>, vector<64x128xf32> -> vector<64x128xf32>
    %141 = arith.addf %138, %140 : vector<64x128xf32>
    %142 = vector.broadcast %133 : vector<1x128xf32> to vector<64x128xf32>
    %143 = arith.addf %141, %142 : vector<64x128xf32>
    %cst_65 = arith.constant dense<0xFF800000> : vector<64xf32>
    %144 = vector.multi_reduction <maximumf>, %143, %cst_65 [1] : vector<64x128xf32> to vector<64xf32>
    %145 = vector.shape_cast %144 : vector<64xf32> to vector<64x1xf32>
    %146 = vector.broadcast %145 : vector<64x1xf32> to vector<64x128xf32>
    %147 = arith.subf %143, %146 : vector<64x128xf32>
    %148 = math.exp %147 : vector<64x128xf32>
    %cst_66 = arith.constant dense<0.000000e+00> : vector<64xf32>
    %149 = vector.multi_reduction <add>, %148, %cst_66 [1] : vector<64x128xf32> to vector<64xf32>
    %150 = vector.shape_cast %149 : vector<64xf32> to vector<64x1xf32>
    %151 = math.log %150 : vector<64x1xf32>
    %152 = vector.broadcast %151 : vector<64x1xf32> to vector<64x128xf32>
    %153 = arith.subf %147, %152 : vector<64x128xf32>
    %c0_67 = arith.constant 0 : index
    %c0_68 = arith.constant 0 : index
    %c0_69 = arith.constant 0 : index
    %154 = vector.load %arg6[%c0_67, %c0_68, %c0_69] : memref<1x64x128xf32, #tpu.memory_space<vmem>>, vector<1x64x128xf32>
    %155 = vector.shape_cast %154 : vector<1x64x128xf32> to vector<64x128xf32>
    %156 = vector.shape_cast %153 : vector<64x128xf32> to vector<1x64x128xf32>
    tpu.vector_store %arg6[%c0_67, %c0_68, %c0_69], %156 {strides = array<i32>} : memref<1x64x128xf32, #tpu.memory_space<vmem>>, vector<1x64x128xf32>,
    return
  }
  func.func @transform_0(%arg0: i32) -> (i32, i32, i32) {
    %c0_i32 = arith.constant 0 : i32
    %c0_i32_0 = arith.constant 0 : i32
    %c0_i32_1 = arith.constant 0 : i32
    return %arg0, %c0_i32, %c0_i32_0 : i32, i32, i32
  }
  func.func @transform_1(%arg0: i32) -> (i32, i32, i32) {
    %c0_i32 = arith.constant 0 : i32
    %c0_i32_0 = arith.constant 0 : i32
    %c0_i32_1 = arith.constant 0 : i32
    return %arg0, %c0_i32, %c0_i32_0 : i32, i32, i32
  }
  func.func @transform_2(%arg0: i32) -> (i32, i32) {
    %c0_i32 = arith.constant 0 : i32
    %c0_i32_0 = arith.constant 0 : i32
    %c0_i32_1 = arith.constant 0 : i32
    return %c0_i32, %c0_i32_0 : i32, i32
  }
  func.func @transform_3(%arg0: i32) -> (i32, i32) {
    %c0_i32 = arith.constant 0 : i32
    %c0_i32_0 = arith.constant 0 : i32
    %c0_i32_1 = arith.constant 0 : i32
    return %c0_i32, %c0_i32_0 : i32, i32
  }
  func.func @transform_4(%arg0: i32) -> (i32, i32) {
    %c0_i32 = arith.constant 0 : i32
    %c0_i32_0 = arith.constant 0 : i32
    %c0_i32_1 = arith.constant 0 : i32
    return %c0_i32, %c0_i32_0 : i32, i32
  }
  func.func @transform_5(%arg0: i32) -> (i32, i32, i32) {
    %c0_i32 = arith.constant 0 : i32
    %c0_i32_0 = arith.constant 0 : i32
    %c0_i32_1 = arith.constant 0 : i32
    return %arg0, %c0_i32, %c0_i32_0 : i32, i32, i32
  }
}

</mosaic_0001>

<llo_original>
// kernel: tpu_custom_call.1
$region0: #{tpu_custom_call.1}
  #allocation0 [shape = 'u32[]', space=smem, size = 0x4, offset = 0x4, fixed_abs, tag = 'smem constant byte address 0x4 - core index']
  #allocation1 [shape = 'u32[144,128]{1,0:T(1,128)}', space=vmem, size = 0x12000, scoped, tag = 'internal scratch']
  %s0 = inlined_call_operand.vmem [shape: bf16[8,64,16], index: 0, kind: input, shape index: {}]
  %s1 = inlined_call_operand.vmem [shape: bf16[8,64,64], index: 1, kind: input, shape index: {}]
  %s2 = inlined_call_operand.vmem [shape: bf16[176,32], index: 2, kind: input, shape index: {}]
  %s3 = inlined_call_operand.vmem [shape: bf16[96,128], index: 3, kind: input, shape index: {}]
  %s4 = inlined_call_operand.vmem [shape: f32[16,128], index: 4, kind: input, shape index: {}]
  %s5 = inlined_call_operand.hbm [shape: f32[8,64,128], index: 5, kind: output, shape index: {}]
  %s6 = sld [smem:[#allocation0]]
  $region53: #{tpu_custom_call.1} parent=0
    _
  %s8 = ssub.s32 1, %s6
  %s9 = scalar_select 0, %s8, %s6
  $region1: #{tpu_custom_call.1} parent=0
    #allocation2 [shape = 'u8[65536]{0}', space=vmem, size = 0x10000, scoped, tag = 'output window, operand 0']
    #allocation3 [shape = 's32[2]{0}', space=sflag, size = 0x8, scoped, tag = 'scoped memory for tpu_custom_call.1']
    %10 = vsyncpa [#allocation3], 0
    %s11 = scalar_lea.sflag [#allocation3], 1
    %12 = vsyncpa %s11, 0
    loop: start=0, step=1, limit=10
    $region2: #{tpu_custom_call.1} parent=1 // loop_pre_header
      _
    $region3: #{tpu_custom_call.1} parent=1 // loop_header
      %s14 = sphi 0, %s18
      %p15 = scmp.ge.s32.totalorder %s14, 10
      %s24 = sphi 0, %s26
      %s27 = sphi 0, %s24
      %s28 = sphi 0, %s27
      %s44 = sphi 0, %s28
      %s50 = sphi 0, %s52
      %s53 = sphi 0, %s50
      %s54 = sphi 0, %s53
      %s70 = sphi 0, %s54
      %s74 = sphi 0, %s74
      %s76 = sphi 0, %s74
      %s77 = sphi 0, %s76
      %s91 = sphi 0, %s77
      %s95 = sphi 0, %s95
      %s97 = sphi 0, %s95
      %s98 = sphi 0, %s97
      %s112 = sphi 0, %s98
      %s116 = sphi 0, %s116
      %s118 = sphi 0, %s116
      %s119 = sphi 0, %s118
      %s133 = sphi 0, %s119
      %s139 = sphi 0, %s141
      %s142 = sphi 0, %s139
      %s143 = sphi 0, %s142
      %s159 = sphi 0, %s143
    $region4: #{tpu_custom_call.1} parent=1 // loop_header_branch
      %17 = sbr.rel (%p15) target = $region8
    $region5: #{tpu_custom_call.1} parent=1 // loop_body
      %s19 = ssub.s32 %s14, 1
      %s20 = ssub.s32 %s14, 2
      %s21 = sadd.s32 %s14, 1
      %s22 = ssub.s32 %s14, %s21
      %p23 = scmp.eq.s32.totalorder %s22, 0
      %s25 = sadd.s32 %s24, 1
      %s26 = scalar_select %p23, %s24, %s25
      %p29 = pneg %p23
      %p30 = scmp.eq.s32.totalorder %s14, 7
      %p31 = por %p29, %p30
      %p32 = scmp.ne.s32.totalorder %s24, %s27
      %p33 = scmp.eq.s32.totalorder %s14, 0
      %p34 = por %p32, %p33
      %p35 = scmp.ne.s32.totalorder %s24, %s27
      %p36 = scmp.eq.s32.totalorder %s19, 7
      %p37 = por %p35, %p36
      %p38 = scmp.ne.s32.totalorder %s27, %s28
      %p39 = scmp.eq.s32.totalorder %s19, 0
      %p40 = por %p38, %p39
      %p41 = scmp.ne.s32.totalorder %s27, %s28
      %p42 = scmp.eq.s32.totalorder %s20, 7
      %p43 = por %p41, %p42
      %p45 = scmp.ne.s32.totalorder %s28, %s44
      %p46 = scmp.eq.s32.totalorder %s20, 0
      %p47 = por %p45, %p46
      %s48 = ssub.s32 %s14, %s21
      %p49 = scmp.eq.s32.totalorder %s48, 0
      %s51 = sadd.s32 %s50, 1
      %s52 = scalar_select %p49, %s50, %s51
      %p55 = pneg %p49
      %p56 = scmp.eq.s32.totalorder %s14, 7
      %p57 = por %p55, %p56
      %p58 = scmp.ne.s32.totalorder %s50, %s53
      %p59 = scmp.eq.s32.totalorder %s14, 0
      %p60 = por %p58, %p59
      %p61 = scmp.ne.s32.totalorder %s50, %s53
      %p62 = scmp.eq.s32.totalorder %s19, 7
      %p63 = por %p61, %p62
      %p64 = scmp.ne.s32.totalorder %s53, %s54
      %p65 = scmp.eq.s32.totalorder %s19, 0
      %p66 = por %p64, %p65
      %p67 = scmp.ne.s32.totalorder %s53, %s54
      %p68 = scmp.eq.s32.totalorder %s20, 7
      %p69 = por %p67, %p68
      %p71 = scmp.ne.s32.totalorder %s54, %s70
      %p72 = scmp.eq.s32.totalorder %s20, 0
      %p73 = por %p71, %p72
      %s75 = sadd.s32 %s74, 1
      %p78 = scmp.eq.s32.totalorder %s14, 7
      %p79 = scmp.ne.s32.totalorder %s74, %s76
      %p80 = scmp.eq.s32.totalorder %s14, 0
      %p81 = por %p79, %p80
      %p82 = scmp.ne.s32.totalorder %s74, %s76
      %p83 = scmp.eq.s32.totalorder %s19, 7
      %p84 = por %p82, %p83
      %p85 = scmp.ne.s32.totalorder %s76, %s77
      %p86 = scmp.eq.s32.totalorder %s19, 0
      %p87 = por %p85, %p86
      %p88 = scmp.ne.s32.totalorder %s76, %s77
      %p89 = scmp.eq.s32.totalorder %s20, 7
      %p90 = por %p88, %p89
      %p92 = scmp.ne.s32.totalorder %s77, %s91
      %p93 = scmp.eq.s32.totalorder %s20, 0
      %p94 = por %p92, %p93
      %s96 = sadd.s32 %s95, 1
      %p99 = scmp.eq.s32.totalorder %s14, 7
      %p100 = scmp.ne.s32.totalorder %s95, %s97
      %p101 = scmp.eq.s32.totalorder %s14, 0
      %p102 = por %p100, %p101
      %p103 = scmp.ne.s32.totalorder %s95, %s97
      %p104 = scmp.eq.s32.totalorder %s19, 7
      %p105 = por %p103, %p104
      %p106 = scmp.ne.s32.totalorder %s97, %s98
      %p107 = scmp.eq.s32.totalorder %s19, 0
      %p108 = por %p106, %p107
      %p109 = scmp.ne.s32.totalorder %s97, %s98
      %p110 = scmp.eq.s32.totalorder %s20, 7
      %p111 = por %p109, %p110
      %p113 = scmp.ne.s32.totalorder %s98, %s112
      %p114 = scmp.eq.s32.totalorder %s20, 0
      %p115 = por %p113, %p114
      %s117 = sadd.s32 %s116, 1
      %p120 = scmp.eq.s32.totalorder %s14, 7
      %p121 = scmp.ne.s32.totalorder %s116, %s118
      %p122 = scmp.eq.s32.totalorder %s14, 0
      %p123 = por %p121, %p122
      %p124 = scmp.ne.s32.totalorder %s116, %s118
      %p125 = scmp.eq.s32.totalorder %s19, 7
      %p126 = por %p124, %p125
      %p127 = scmp.ne.s32.totalorder %s118, %s119
      %p128 = scmp.eq.s32.totalorder %s19, 0
      %p129 = por %p127, %p128
      %p130 = scmp.ne.s32.totalorder %s118, %s119
      %p131 = scmp.eq.s32.totalorder %s20, 7
      %p132 = por %p130, %p131
      %p134 = scmp.ne.s32.totalorder %s119, %s133
      %p135 = scmp.eq.s32.totalorder %s20, 0
      %p136 = por %p134, %p135
      %s137 = ssub.s32 %s14, %s21
      %p138 = scmp.eq.s32.totalorder %s137, 0
      %s140 = sadd.s32 %s139, 1
      %s141 = scalar_select %p138, %s139, %s140
      %p144 = pneg %p138
      %p145 = scmp.eq.s32.totalorder %s14, 7
      %p146 = por %p144, %p145
      %p147 = scmp.ne.s32.totalorder %s139, %s142
      %p148 = scmp.eq.s32.totalorder %s14, 0
      %p149 = por %p147, %p148
      %p150 = scmp.ne.s32.totalorder %s139, %s142
      %p151 = scmp.eq.s32.totalorder %s19, 7
      %p152 = por %p150, %p151
      %p153 = scmp.ne.s32.totalorder %s142, %s143
      %p154 = scmp.eq.s32.totalorder %s19, 0
      %p155 = por %p153, %p154
      %p156 = scmp.ne.s32.totalorder %s142, %s143
      %p157 = scmp.eq.s32.totalorder %s20, 7
      %p158 = por %p156, %p157
      %p160 = scmp.ne.s32.totalorder %s143, %s159
      %p161 = scmp.eq.s32.totalorder %s20, 0
      %p162 = por %p160, %p161
      %p163 = scmp.le.s32.totalorder 1, %s14
      %p164 = scmp.lt.s32.totalorder %s14, 9
      %p165 = pnand %p163, %p164
      %p166 = pneg %p165
      // Predicated region
      $region9: #{tpu_custom_call.1} parent=5 // pred_check
        _
      $region10: #{tpu_custom_call.1} parent=5 // pred_check_branch
        %168 = sbr.rel (%p165) target = $region12
      $region11: #{tpu_custom_call.1} parent=5 // pred_region
        %s169 = ssub.s32 %s14, 1
        // Predicated region
        $region13: #{tpu_custom_call.1} parent=11 // pred_check
          %p170 = pneg %p87
        $region14: #{tpu_custom_call.1} parent=11 // pred_check_branch
          %172 = sbr.rel (%p170) target = $region16
        $region15: #{tpu_custom_call.1} parent=11 // pred_region
          _
        $region16: #{tpu_custom_call.1} parent=11 // pred_fallthru
          _
        // Predicated region
        $region17: #{tpu_custom_call.1} parent=11 // pred_check
          %p173 = pneg %p108
        $region18: #{tpu_custom_call.1} parent=11 // pred_check_branch
          %175 = sbr.rel (%p173) target = $region20
        $region19: #{tpu_custom_call.1} parent=11 // pred_region
          _
        $region20: #{tpu_custom_call.1} parent=11 // pred_fallthru
          _
        // Predicated region
        $region21: #{tpu_custom_call.1} parent=11 // pred_check
          %p176 = pneg %p129
        $region22: #{tpu_custom_call.1} parent=11 // pred_check_branch
          %178 = sbr.rel (%p176) target = $region24
        $region23: #{tpu_custom_call.1} parent=11 // pred_region
          _
        $region24: #{tpu_custom_call.1} parent=11 // pred_fallthru
          _
      $region12: #{tpu_custom_call.1} parent=5 // pred_fallthru
        _
      %p179 = scmp.lt.s32.totalorder %s14, 8
      // Predicated region
      $region25: #{tpu_custom_call.1} parent=5 // pred_check
        %p180 = pneg %p179
      $region26: #{tpu_custom_call.1} parent=5 // pred_check_branch
        %182 = sbr.rel (%p180) target = $region28
      $region27: #{tpu_custom_call.1} parent=5 // pred_region
        // Predicated region
        $region29: #{tpu_custom_call.1} parent=27 // pred_check
          %p183 = pneg %p34
        $region30: #{tpu_custom_call.1} parent=27 // pred_check_branch
          %185 = sbr.rel (%p183) target = $region32
        $region31: #{tpu_custom_call.1} parent=27 // pred_region
          %p186 = scmp.lt.s32.totalorder %s14, 7
          %s187 = scalar_select %p186, %s14, 7
          %s188 = smul.addr %s187, 8
          %s189 = smul.addr %s188, 4
          %s190 = scalar_lea.vmem %s0, %s189
        $region32: #{tpu_custom_call.1} parent=27 // pred_fallthru
          _
        // Predicated region
        $region33: #{tpu_custom_call.1} parent=27 // pred_check
          %p191 = pneg %p60
        $region34: #{tpu_custom_call.1} parent=27 // pred_check_branch
          %193 = sbr.rel (%p191) target = $region36
        $region35: #{tpu_custom_call.1} parent=27 // pred_region
          %p194 = scmp.lt.s32.totalorder %s14, 7
          %s195 = scalar_select %p194, %s14, 7
          %s196 = smul.addr %s195, 8
          %s197 = smul.addr %s196, 4
          %s198 = scalar_lea.vmem %s1, %s197
        $region36: #{tpu_custom_call.1} parent=27 // pred_fallthru
          _
      $region28: #{tpu_custom_call.1} parent=5 // pred_fallthru
        _
      %p199 = scmp.le.s32.totalorder 1, %s14
      %p200 = scmp.lt.s32.totalorder %s14, 9
      %p201 = pnand %p199, %p200
      %p202 = pneg %p201
      // Predicated region
      $region37: #{tpu_custom_call.1} parent=5 // pred_check
        _
      $region38: #{tpu_custom_call.1} parent=5 // pred_check_branch
        %204 = sbr.rel (%p201) target = $region40
      $region39: #{tpu_custom_call.1} parent=5 // pred_region
        %s205 = ssub.s32 %s14, 1
        %p206 = scmp.lt.s32.totalorder %s19, 7
        %s207 = scalar_select %p206, %s19, 7
        %s208 = smul.addr %s207, 8
        %s209 = smul.addr %s208, 4
        %s210 = scalar_lea.vmem %s0, %s209
        %p211 = pneg %p40
        %p212 = pneg %p37
        %p213 = scmp.lt.s32.totalorder %s19, 7
        %s214 = scalar_select %p213, %s19, 7
        %s215 = smul.addr %s214, 8
        %s216 = smul.addr %s215, 4
        %s217 = scalar_lea.vmem %s1, %s216
        %p218 = pneg %p66
        %p219 = pneg %p63
        %p220 = pneg %p87
        %p221 = pneg %p84
        %p222 = pneg %p108
        %p223 = pneg %p105
        %p224 = pneg %p129
        %p225 = pneg %p126
        %p226 = pneg %p155
        %p227 = pneg %p152
        %s228 = sand.u32 %s142, 1
        %s229 = scalar_lea.sflag [#allocation3], %s228
        %s230 = sand.u32 %s142, 1
        %s231 = smul.addr %s230, 64
        %s232 = scalar_lea.vmem [#allocation2], %s231
        %p233 = scmp.lt.s32.totalorder %s19, 7
        %s234 = scalar_select %p233, %s19, 7
        %s235 = smul.addr %s234, 8
        %s236 = smul.addr %s235, 4
        %s237 = scalar_lea.vmem %s0, %s236
        %p238 = scmp.lt.s32.totalorder %s19, 7
        %s239 = scalar_select %p238, %s19, 7
        %s240 = smul.addr %s239, 8
        %s241 = smul.addr %s240, 4
        %s242 = scalar_lea.vmem %s1, %s241
        %v244 = vld [vmem:[%s242] sm:$0xf]
        %v245 = vld [vmem:[%s242 + $0x4] sm:$0xf]
        %v246 = vld [vmem:[%s242 + $0x8] sm:$0xf]
        %v247 = vld [vmem:[%s242 + $0xc] sm:$0xf]
        %v248 = vld [vmem:[%s242 + $0x10] sm:$0xf]
        %v249 = vld [vmem:[%s242 + $0x14] sm:$0xf]
        %v250 = vld [vmem:[%s242 + $0x18] sm:$0xf]
        %v251 = vld [vmem:[%s242 + $0x1c] sm:$0xf]
        %v252 = vld [vmem:[%s237] sm:$0xf]
        %v253 = vld [vmem:[%s237 + $0x4] sm:$0xf]
        %v254 = vld [vmem:[%s237 + $0x8] sm:$0xf]
        %v255 = vld [vmem:[%s237 + $0xc] sm:$0xf]
        %v256 = vld [vmem:[%s237 + $0x10] sm:$0xf]
        %v257 = vld [vmem:[%s237 + $0x14] sm:$0xf]
        %v258 = vld [vmem:[%s237 + $0x18] sm:$0xf]
        %v259 = vld [vmem:[%s237 + $0x1c] sm:$0xf]
        %v268 = vunpack.c.l.b16 %v244
        %v269 = vunpack.c.l.b16 %v245
        %v270 = vunpack.c.l.b16 %v246
        %v271 = vunpack.c.l.b16 %v247
        %v272 = vunpack.c.l.b16 %v248
        %v273 = vunpack.c.l.b16 %v249
        %v274 = vunpack.c.l.b16 %v250
        %v275 = vunpack.c.l.b16 %v251
        %v276 = vpack.c.b16 %v269, %v268
        %v277 = vpack.c.b16 %v271, %v270
        %v278 = vpack.c.b16 %v273, %v272
        %v279 = vpack.c.b16 %v275, %v274
        %v288 = vunpack.c.l.b16 %v252
        %v289 = vunpack.c.l.b16 %v253
        %v290 = vunpack.c.l.b16 %v254
        %v291 = vunpack.c.l.b16 %v255
        %v292 = vunpack.c.l.b16 %v256
        %v293 = vunpack.c.l.b16 %v257
        %v294 = vunpack.c.l.b16 %v258
        %v295 = vunpack.c.l.b16 %v259
        %v296 = vpack.c.b16 %v289, %v288
        %v297 = vpack.c.b16 %v291, %v290
        %v298 = vpack.c.b16 %v293, %v292
        %v299 = vpack.c.b16 %v295, %v294
        %vm304 = vcmask 523264
        %v306 = vsel %vm304, %v276, 0
        %v309 = vsel %vm304, %v277, 0
        %v312 = vsel %vm304, %v278, 0
        %v315 = vsel %vm304, %v279, 0
        %317 = vmatprep.subr.bf16.mxu0 0
        %318 = vmatpush1.bf16.msra.mxu0 %v296
        %319 = vmatprep.subr.bf16.mxu0 0
        %320 = vmatpush1.bf16.msra.mxu0 %v297
        %321 = vmatprep.subr.bf16.mxu0 0
        %322 = vmatpush1.bf16.msra.mxu0 %v298
        %323 = vmatprep.subr.bf16.mxu0 0
        %324 = vmatpush1.bf16.msra.mxu0 %v299
        %325 = vmatprep.subr.bf16.mxu0 0
        %326 = vmatpush1.bf16.msra.mxu0 0
        %327 = vmatprep.subr.bf16.mxu0 0
        %328 = vmatpush1.bf16.msra.mxu0 0
        %329 = vmatprep.subr.bf16.mxu0 0
        %330 = vmatpush1.bf16.msra.mxu0 0
        %331 = vmatprep.subr.bf16.mxu0 0
        %332 = vmatpush1.bf16.msra.mxu0 0
        %333 = vmatprep.subr.bf16.mxu0 0
        %334 = vmatpush1.bf16.msra.mxu0 0
        %335 = vmatprep.subr.bf16.mxu0 0
        %336 = vmatpush1.bf16.msra.mxu0 0
        %337 = vmatprep.subr.bf16.mxu0 0
        %338 = vmatpush1.bf16.msra.mxu0 0
        %339 = vmatprep.subr.bf16.mxu0 0
        %340 = vmatpush1.bf16.msra.mxu0 0
        %341 = vmatprep.subr.bf16.mxu0 0
        %342 = vmatpush1.bf16.msra.mxu0 0
        %343 = vmatprep.subr.bf16.mxu0 0
        %344 = vmatpush1.bf16.msra.mxu0 0
        %345 = vmatprep.subr.bf16.mxu0 0
        %346 = vmatpush1.bf16.msra.mxu0 0
        %347 = vmatprep.subr.bf16.mxu0 0
        %348 = vmatpush1.bf16.msra.mxu0 0
        %349 = vmatprep.mubr.bf16.mxu0 0
        %350 = vmatmul.mubr.bf16.gmra.mrb[0].mxu0 %v306
        %v351 = vpop.f32.mrb[0].mxu0
        %v352 = vadd.f32 0.0, %v351
        %v353 = vpop.f32.mrb[0].mxu0
        %v354 = vpop.f32.mrb[0].mxu0
        %v355 = vadd.f32 0.0, %v354
        %v356 = vpop.f32.mrb[0].mxu0
        %357 = vmatprep.mubr.bf16.mxu0 0
        %358 = vmatmul.mubr.bf16.gmra.mrb[0].mxu0 %v309
        %v359 = vpop.f32.mrb[0].mxu0
        %v360 = vadd.f32 0.0, %v359
        %v361 = vpop.f32.mrb[0].mxu0
        %v362 = vpop.f32.mrb[0].mxu0
        %v363 = vadd.f32 0.0, %v362
        %v364 = vpop.f32.mrb[0].mxu0
        %365 = vmatprep.mubr.bf16.mxu0 0
        %366 = vmatmul.mubr.bf16.gmra.mrb[0].mxu0 %v312
        %v367 = vpop.f32.mrb[0].mxu0
        %v368 = vadd.f32 0.0, %v367
        %v369 = vpop.f32.mrb[0].mxu0
        %v370 = vpop.f32.mrb[0].mxu0
        %v371 = vadd.f32 0.0, %v370
        %v372 = vpop.f32.mrb[0].mxu0
        %373 = vmatprep.mubr.bf16.mxu0 0
        %374 = vmatmul.mubr.bf16.gmra.mrb[0].mxu0 %v315
        %v375 = vpop.f32.mrb[0].mxu0
        %v376 = vadd.f32 0.0, %v375
        %v377 = vpop.f32.mrb[0].mxu0
        %v378 = vpop.f32.mrb[0].mxu0
        %v379 = vadd.f32 0.0, %v378
        %v380 = vpop.f32.mrb[0].mxu0
        %381 = vdwg.mxu0
        %v382 = vld [vmem:[%s4] sm:$0x1]
        %v383 = vld [vmem:[%s4 + $0x1] sm:$0x1]
        %v384 = vld [vmem:[%s4 + $0x2] sm:$0x1]
        %v385 = vld [vmem:[%s4 + $0x3] sm:$0x1]
        %v386 = vpack.c.bf16 %v355, %v352
        %v387 = vpack.c.bf16 %v363, %v360
        %v388 = vpack.c.bf16 %v371, %v368
        %v389 = vpack.c.bf16 %v379, %v376
        %v390 = vld [vmem:[%s2] sm:$0xf]
        %v391 = vld [vmem:[%s2 + $0x4] sm:$0xf]
        %v392 = vlaneseq
        %v393 = vshrl.u32 %v392, 7
        %v394 = vsub.s32 0, %v393
        %v395 = vrot.slane %v382, %v394
        %v398 = vunpack.c.l.b16 %v390
        %v399 = vunpack.c.l.b16 %v391
        %v400 = vpack.c.b16 %v399, %v398
        %vm402 = vcmask 130048
        %v404 = vsel %vm402, %v386, 0
        %v407 = vsel %vm402, %v387, 0
        %v410 = vsel %vm402, %v388, 0
        %v413 = vsel %vm402, %v389, 0
        %415 = vmatprep.subr.bf16.mxu0 0
        %416 = vmatpush1.bf16.msra.mxu0 %v400
        %417 = vmatprep.subr.bf16.mxu0 0
        %418 = vmatpush1.bf16.msra.mxu0 0
        %419 = vmatprep.subr.bf16.mxu0 0
        %420 = vmatpush1.bf16.msra.mxu0 0
        %421 = vmatprep.subr.bf16.mxu0 0
        %422 = vmatpush1.bf16.msra.mxu0 0
        %423 = vmatprep.subr.bf16.mxu0 0
        %424 = vmatpush1.bf16.msra.mxu0 0
        %425 = vmatprep.subr.bf16.mxu0 0
        %426 = vmatpush1.bf16.msra.mxu0 0
        %427 = vmatprep.subr.bf16.mxu0 0
        %428 = vmatpush1.bf16.msra.mxu0 0
        %429 = vmatprep.subr.bf16.mxu0 0
        %430 = vmatpush1.bf16.msra.mxu0 0
        %431 = vmatprep.subr.bf16.mxu0 0
        %432 = vmatpush1.bf16.msra.mxu0 0
        %433 = vmatprep.subr.bf16.mxu0 0
        %434 = vmatpush1.bf16.msra.mxu0 0
        %435 = vmatprep.subr.bf16.mxu0 0
        %436 = vmatpush1.bf16.msra.mxu0 0
        %437 = vmatprep.subr.bf16.mxu0 0
        %438 = vmatpush1.bf16.msra.mxu0 0
        %439 = vmatprep.subr.bf16.mxu0 0
        %440 = vmatpush1.bf16.msra.mxu0 0
        %441 = vmatprep.subr.bf16.mxu0 0
        %442 = vmatpush1.bf16.msra.mxu0 0
        %443 = vmatprep.subr.bf16.mxu0 0
        %444 = vmatpush1.bf16.msra.mxu0 0
        %445 = vmatprep.subr.bf16.mxu0 0
        %446 = vmatpush1.bf16.msra.mxu0 0
        %447 = vmatprep.mubr.bf16.mxu0 0
        %448 = vmatmul.mubr.bf16.gmra.mrb[0].mxu0 %v404
        %v449 = vpop.f32.mrb[0].mxu0
        %v450 = vadd.f32 %v395, %v449
        %v451 = vpop.f32.mrb[0].mxu0
        %v452 = vpop.f32.mrb[0].mxu0
        %v453 = vadd.f32 %v395, %v452
        %v454 = vpop.f32.mrb[0].mxu0
        %455 = vmatprep.mubr.bf16.mxu0 0
        %456 = vmatmul.mubr.bf16.gmra.mrb[0].mxu0 %v407
        %v457 = vpop.f32.mrb[0].mxu0
        %v458 = vadd.f32 %v395, %v457
        %v459 = vpop.f32.mrb[0].mxu0
        %v460 = vpop.f32.mrb[0].mxu0
        %v461 = vadd.f32 %v395, %v460
        %v462 = vpop.f32.mrb[0].mxu0
        %463 = vmatprep.mubr.bf16.mxu0 0
        %464 = vmatmul.mubr.bf16.gmra.mrb[0].mxu0 %v410
        %v465 = vpop.f32.mrb[0].mxu0
        %v466 = vadd.f32 %v395, %v465
        %v467 = vpop.f32.mrb[0].mxu0
        %v468 = vpop.f32.mrb[0].mxu0
        %v469 = vadd.f32 %v395, %v468
        %v470 = vpop.f32.mrb[0].mxu0
        %471 = vmatprep.mubr.bf16.mxu0 0
        %472 = vmatmul.mubr.bf16.gmra.mrb[0].mxu0 %v413
        %v473 = vpop.f32.mrb[0].mxu0
        %v474 = vadd.f32 %v395, %v473
        %v475 = vpop.f32.mrb[0].mxu0
        %v476 = vpop.f32.mrb[0].mxu0
        %v477 = vadd.f32 %v395, %v476
        %v478 = vpop.f32.mrb[0].mxu0
        %479 = vdwg.mxu0
        %vm480 = vcmask 261120
        %v481 = vsel %vm480, %v450, 0.0
        %v482 = vsel %vm480, %v453, 0.0
        %v483 = vadd.f32 %v481, %v482
        %v484 = vsel %vm480, %v458, 0.0
        %v485 = vadd.f32 %v483, %v484
        %v486 = vsel %vm480, %v461, 0.0
        %v487 = vadd.f32 %v485, %v486
        %v488 = vsel %vm480, %v466, 0.0
        %v489 = vadd.f32 %v487, %v488
        %v490 = vsel %vm480, %v469, 0.0
        %v491 = vadd.f32 %v489, %v490
        %v492 = vsel %vm480, %v474, 0.0
        %v493 = vadd.f32 %v491, %v492
        %v494 = vsel %vm480, %v477, 0.0
        %v495 = vadd.f32 %v493, %v494
        %v496 = vrot.slane %v495, 4
        %v497 = vadd.f32 %v495, %v496
        %v498 = vrot.slane %v497, 2
        %v499 = vadd.f32 %v497, %v498
        %v500 = vrot.slane %v499, 1
        %v501 = vadd.f32 %v499, %v500
        %v502 = vmul.f32 %v450, %v450
        %v503 = vmul.f32 %v453, %v453
        %v504 = vmul.f32 %v458, %v458
        %v505 = vmul.f32 %v461, %v461
        %v506 = vmul.f32 %v466, %v466
        %v507 = vmul.f32 %v469, %v469
        %v508 = vmul.f32 %v474, %v474
        %v509 = vmul.f32 %v477, %v477
        %v510 = vsel %vm480, %v502, 0.0
        %v511 = vsel %vm480, %v503, 0.0
        %v512 = vadd.f32 %v510, %v511
        %v513 = vsel %vm480, %v504, 0.0
        %v514 = vadd.f32 %v512, %v513
        %v515 = vsel %vm480, %v505, 0.0
        %v516 = vadd.f32 %v514, %v515
        %v517 = vsel %vm480, %v506, 0.0
        %v518 = vadd.f32 %v516, %v517
        %v519 = vsel %vm480, %v507, 0.0
        %v520 = vadd.f32 %v518, %v519
        %v521 = vsel %vm480, %v508, 0.0
        %v522 = vadd.f32 %v520, %v521
        %v523 = vsel %vm480, %v509, 0.0
        %v524 = vadd.f32 %v522, %v523
        %v525 = vrot.slane %v524, 4
        %v526 = vadd.f32 %v524, %v525
        %v527 = vrot.slane %v526, 2
        %v528 = vadd.f32 %v526, %v527
        %v529 = vrot.slane %v528, 1
        %v530 = vadd.f32 %v528, %v529
        %v531 = vmul.f32 %v501, 0.015625
        %v532 = vmul.f32 %v530, 0.015625
        %v533 = vmul.f32 %v531, %v531
        %v534 = vsub.f32 %v532, %v533
        %v535 = vmax.f32 %v534, 0.0
        %v536 = vadd.f32 %v535, 1e-05
        %v537 = vrsqrt.pop %v536
        %v538 = vmul.f32 %v383, %v537
        %v539 = vmul.f32 %v531, %v538
        %v540 = vsub.f32 %v384, %v539
        %v541 = vlaneseq
        %v542 = vshrl.u32 %v541, 7
        %v543 = vsub.s32 0, %v542
        %v544 = vrot.slane %v538, %v543
        %v545 = vmul.f32 %v450, %v544
        %v546 = vmul.f32 %v453, %v544
        %v547 = vmul.f32 %v458, %v544
        %v548 = vmul.f32 %v461, %v544
        %v549 = vmul.f32 %v466, %v544
        %v550 = vmul.f32 %v469, %v544
        %v551 = vmul.f32 %v474, %v544
        %v552 = vmul.f32 %v477, %v544
        %v553 = vlaneseq
        %v554 = vshrl.u32 %v553, 7
        %v555 = vsub.s32 0, %v554
        %v556 = vrot.slane %v540, %v555
        %v557 = vadd.f32 %v545, %v556
        %v558 = vadd.f32 %v546, %v556
        %v559 = vadd.f32 %v547, %v556
        %v560 = vadd.f32 %v548, %v556
        %v561 = vadd.f32 %v549, %v556
        %v562 = vadd.f32 %v550, %v556
        %v563 = vadd.f32 %v551, %v556
        %v564 = vadd.f32 %v552, %v556
        %v565 = vmax.f32 %v557, 0.0
        %v566 = vmax.f32 %v558, 0.0
        %v567 = vmax.f32 %v559, 0.0
        %v568 = vmax.f32 %v560, 0.0
        %v569 = vmax.f32 %v561, 0.0
        %v570 = vmax.f32 %v562, 0.0
        %v571 = vmax.f32 %v563, 0.0
        %v572 = vmax.f32 %v564, 0.0
        %v573 = vpack.c.bf16 %v566, %v565
        %v574 = vpack.c.bf16 %v568, %v567
        %v575 = vpack.c.bf16 %v570, %v569
        %v576 = vpack.c.bf16 %v572, %v571
        %v577 = vld [vmem:[%s2 + $0x8] sm:$0xf]
        %v578 = vld [vmem:[%s2 + $0xc] sm:$0xf]
        %v579 = vld [vmem:[%s2 + $0x10] sm:$0xf]
        %v580 = vld [vmem:[%s2 + $0x14] sm:$0xf]
        %v581 = vlaneseq
        %v582 = vshrl.u32 %v581, 7
        %v583 = vsub.s32 0, %v582
        %v584 = vrot.slane %v385, %v583
        %v589 = vunpack.c.l.b16 %v577
        %v590 = vunpack.c.l.b16 %v578
        %v591 = vunpack.c.l.b16 %v579
        %v592 = vunpack.c.l.b16 %v580
        %v593 = vpack.c.b16 %v590, %v589
        %v594 = vpack.c.b16 %v592, %v591
        %v598 = vsel %vm480, %v573, 0
        %v601 = vsel %vm480, %v574, 0
        %v604 = vsel %vm480, %v575, 0
        %v607 = vsel %vm480, %v576, 0
        %609 = vmatprep.subr.bf16.mxu0 0
        %610 = vmatpush1.bf16.msra.mxu0 %v593
        %611 = vmatprep.subr.bf16.mxu0 0
        %612 = vmatpush1.bf16.msra.mxu0 %v594
        %613 = vmatprep.subr.bf16.mxu0 0
        %614 = vmatpush1.bf16.msra.mxu0 0
        %615 = vmatprep.subr.bf16.mxu0 0
        %616 = vmatpush1.bf16.msra.mxu0 0
        %617 = vmatprep.subr.bf16.mxu0 0
        %618 = vmatpush1.bf16.msra.mxu0 0
        %619 = vmatprep.subr.bf16.mxu0 0
        %620 = vmatpush1.bf16.msra.mxu0 0
        %621 = vmatprep.subr.bf16.mxu0 0
        %622 = vmatpush1.bf16.msra.mxu0 0
        %623 = vmatprep.subr.bf16.mxu0 0
        %624 = vmatpush1.bf16.msra.mxu0 0
        %625 = vmatprep.subr.bf16.mxu0 0
        %626 = vmatpush1.bf16.msra.mxu0 0
        %627 = vmatprep.subr.bf16.mxu0 0
        %628 = vmatpush1.bf16.msra.mxu0 0
        %629 = vmatprep.subr.bf16.mxu0 0
        %630 = vmatpush1.bf16.msra.mxu0 0
        %631 = vmatprep.subr.bf16.mxu0 0
        %632 = vmatpush1.bf16.msra.mxu0 0
        %633 = vmatprep.subr.bf16.mxu0 0
        %634 = vmatpush1.bf16.msra.mxu0 0
        %635 = vmatprep.subr.bf16.mxu0 0
        %636 = vmatpush1.bf16.msra.mxu0 0
        %637 = vmatprep.subr.bf16.mxu0 0
        %638 = vmatpush1.bf16.msra.mxu0 0
        %639 = vmatprep.subr.bf16.mxu0 0
        %640 = vmatpush1.bf16.msra.mxu0 0
        %641 = vmatprep.mubr.bf16.mxu0 0
        %642 = vmatmul.mubr.bf16.gmra.mrb[0].mxu0 %v598
        %v643 = vpop.f32.mrb[0].mxu0
        %v644 = vadd.f32 %v584, %v643
        %v645 = vpop.f32.mrb[0].mxu0
        %v646 = vpop.f32.mrb[0].mxu0
        %v647 = vadd.f32 %v584, %v646
        %v648 = vpop.f32.mrb[0].mxu0
        %649 = vmatprep.mubr.bf16.mxu0 0
        %650 = vmatmul.mubr.bf16.gmra.mrb[0].mxu0 %v601
        %v651 = vpop.f32.mrb[0].mxu0
        %v652 = vadd.f32 %v584, %v651
        %v653 = vpop.f32.mrb[0].mxu0
        %v654 = vpop.f32.mrb[0].mxu0
        %v655 = vadd.f32 %v584, %v654
        %v656 = vpop.f32.mrb[0].mxu0
        %657 = vmatprep.mubr.bf16.mxu0 0
        %658 = vmatmul.mubr.bf16.gmra.mrb[0].mxu0 %v604
        %v659 = vpop.f32.mrb[0].mxu0
        %v660 = vadd.f32 %v584, %v659
        %v661 = vpop.f32.mrb[0].mxu0
        %v662 = vpop.f32.mrb[0].mxu0
        %v663 = vadd.f32 %v584, %v662
        %v664 = vpop.f32.mrb[0].mxu0
        %665 = vmatprep.mubr.bf16.mxu0 0
        %666 = vmatmul.mubr.bf16.gmra.mrb[0].mxu0 %v607
        %v667 = vpop.f32.mrb[0].mxu0
        %v668 = vadd.f32 %v584, %v667
        %v669 = vpop.f32.mrb[0].mxu0
        %v670 = vpop.f32.mrb[0].mxu0
        %v671 = vadd.f32 %v584, %v670
        %v672 = vpop.f32.mrb[0].mxu0
        %673 = vdwg.mxu0
        %v674 = vmax.f32 %v644, 0.0
        %v675 = vmax.f32 %v647, 0.0
        %v676 = vmax.f32 %v652, 0.0
        %v677 = vmax.f32 %v655, 0.0
        %v678 = vmax.f32 %v660, 0.0
        %v679 = vmax.f32 %v663, 0.0
        %v680 = vmax.f32 %v668, 0.0
        %v681 = vmax.f32 %v671, 0.0
        %v682 = vpack.c.bf16 %v675, %v674
        %v683 = vpack.c.bf16 %v677, %v676
        %v684 = vpack.c.bf16 %v679, %v678
        %v685 = vpack.c.bf16 %v681, %v680
        %686 = vmatprep.subr.bf16.mxu0 0
        %687 = vmatpush1.bf16.msra.mxu0 %v682
        %688 = vmatprep.subr.bf16.mxu0 0
        %689 = vmatpush1.bf16.msra.mxu0 %v683
        %690 = vmatprep.subr.bf16.mxu0 0
        %691 = vmatpush1.bf16.msra.mxu0 %v684
        %692 = vmatprep.subr.bf16.mxu0 0
        %693 = vmatpush1.bf16.msra.mxu0 %v685
        %694 = vmatprep.subr.bf16.mxu0 0
        %695 = vmatpush1.bf16.msra.mxu0 0
        %696 = vmatprep.subr.bf16.mxu0 0
        %697 = vmatpush1.bf16.msra.mxu0 0
        %698 = vmatprep.subr.bf16.mxu0 0
        %699 = vmatpush1.bf16.msra.mxu0 0
        %700 = vmatprep.subr.bf16.mxu0 0
        %701 = vmatpush1.bf16.msra.mxu0 0
        %702 = vmatprep.subr.bf16.mxu0 0
        %703 = vmatpush1.bf16.msra.mxu0 0
        %704 = vmatprep.subr.bf16.mxu0 0
        %705 = vmatpush1.bf16.msra.mxu0 0
        %706 = vmatprep.subr.bf16.mxu0 0
        %707 = vmatpush1.bf16.msra.mxu0 0
        %708 = vmatprep.subr.bf16.mxu0 0
        %709 = vmatpush1.bf16.msra.mxu0 0
        %710 = vmatprep.subr.bf16.mxu0 0
        %711 = vmatpush1.bf16.msra.mxu0 0
        %712 = vmatprep.subr.bf16.mxu0 0
        %713 = vmatpush1.bf16.msra.mxu0 0
        %714 = vmatprep.subr.bf16.mxu0 0
        %715 = vmatpush1.bf16.msra.mxu0 0
        %716 = vmatprep.subr.bf16.mxu0 0
        %717 = vmatpush1.bf16.msra.mxu0 0
        %718 = vmatprep.mubr.bf16.mxu0 0
        %719 = vmatmul.mubr.bf16.gmra.mrb[0].mxu0 %v306
        %v720 = vpop.f32.mrb[0].mxu0
        %v721 = vadd.f32 0.0, %v720
        %v722 = vpop.f32.mrb[0].mxu0
        %v723 = vpop.f32.mrb[0].mxu0
        %v724 = vadd.f32 0.0, %v723
        %v725 = vpop.f32.mrb[0].mxu0
        %726 = vmatprep.mubr.bf16.mxu0 0
        %727 = vmatmul.mubr.bf16.gmra.mrb[0].mxu0 %v309
        %v728 = vpop.f32.mrb[0].mxu0
        %v729 = vadd.f32 0.0, %v728
        %v730 = vpop.f32.mrb[0].mxu0
        %v731 = vpop.f32.mrb[0].mxu0
        %v732 = vadd.f32 0.0, %v731
        %v733 = vpop.f32.mrb[0].mxu0
        %734 = vmatprep.mubr.bf16.mxu0 0
        %735 = vmatmul.mubr.bf16.gmra.mrb[0].mxu0 %v312
        %v736 = vpop.f32.mrb[0].mxu0
        %v737 = vadd.f32 0.0, %v736
        %v738 = vpop.f32.mrb[0].mxu0
        %v739 = vpop.f32.mrb[0].mxu0
        %v740 = vadd.f32 0.0, %v739
        %v741 = vpop.f32.mrb[0].mxu0
        %742 = vmatprep.mubr.bf16.mxu0 0
        %743 = vmatmul.mubr.bf16.gmra.mrb[0].mxu0 %v315
        %v744 = vpop.f32.mrb[0].mxu0
        %v745 = vadd.f32 0.0, %v744
        %v746 = vpop.f32.mrb[0].mxu0
        %v747 = vpop.f32.mrb[0].mxu0
        %v748 = vadd.f32 0.0, %v747
        %v749 = vpop.f32.mrb[0].mxu0
        %750 = vdwg.mxu0
        %v751 = vld [vmem:[%s4 + $0x4] sm:$0x1]
        %v752 = vld [vmem:[%s4 + $0x5] sm:$0x1]
        %v753 = vld [vmem:[%s4 + $0x6] sm:$0x1]
        %v754 = vld [vmem:[%s4 + $0x7] sm:$0x1]
        %v755 = vpack.c.bf16 %v724, %v721
        %v756 = vpack.c.bf16 %v732, %v729
        %v757 = vpack.c.bf16 %v740, %v737
        %v758 = vpack.c.bf16 %v748, %v745
        %v759 = vld [vmem:[%s2 + $0x18] sm:$0xf]
        %v760 = vld [vmem:[%s2 + $0x1c] sm:$0xf]
        %v761 = vld [vmem:[%s2 + $0x20] sm:$0xf]
        %v762 = vld [vmem:[%s2 + $0x24] sm:$0xf]
        %v763 = vlaneseq
        %v764 = vshrl.u32 %v763, 7
        %v765 = vsub.s32 0, %v764
        %v766 = vrot.slane %v751, %v765
        %v771 = vunpack.c.l.b16 %v759
        %v772 = vunpack.c.l.b16 %v760
        %v773 = vunpack.c.l.b16 %v761
        %v774 = vunpack.c.l.b16 %v762
        %v775 = vpack.c.b16 %v772, %v771
        %v776 = vpack.c.b16 %v774, %v773
        %v780 = vsel %vm480, %v755, 0
        %v783 = vsel %vm480, %v756, 0
        %v786 = vsel %vm480, %v757, 0
        %v789 = vsel %vm480, %v758, 0
        %791 = vmatprep.subr.bf16.mxu0 0
        %792 = vmatpush1.bf16.msra.mxu0 %v775
        %793 = vmatprep.subr.bf16.mxu0 0
        %794 = vmatpush1.bf16.msra.mxu0 %v776
        %795 = vmatprep.subr.bf16.mxu0 0
        %796 = vmatpush1.bf16.msra.mxu0 0
        %797 = vmatprep.subr.bf16.mxu0 0
        %798 = vmatpush1.bf16.msra.mxu0 0
        %799 = vmatprep.subr.bf16.mxu0 0
        %800 = vmatpush1.bf16.msra.mxu0 0
        %801 = vmatprep.subr.bf16.mxu0 0
        %802 = vmatpush1.bf16.msra.mxu0 0
        %803 = vmatprep.subr.bf16.mxu0 0
        %804 = vmatpush1.bf16.msra.mxu0 0
        %805 = vmatprep.subr.bf16.mxu0 0
        %806 = vmatpush1.bf16.msra.mxu0 0
        %807 = vmatprep.subr.bf16.mxu0 0
        %808 = vmatpush1.bf16.msra.mxu0 0
        %809 = vmatprep.subr.bf16.mxu0 0
        %810 = vmatpush1.bf16.msra.mxu0 0
        %811 = vmatprep.subr.bf16.mxu0 0
        %812 = vmatpush1.bf16.msra.mxu0 0
        %813 = vmatprep.subr.bf16.mxu0 0
        %814 = vmatpush1.bf16.msra.mxu0 0
        %815 = vmatprep.subr.bf16.mxu0 0
        %816 = vmatpush1.bf16.msra.mxu0 0
        %817 = vmatprep.subr.bf16.mxu0 0
        %818 = vmatpush1.bf16.msra.mxu0 0
        %819 = vmatprep.subr.bf16.mxu0 0
        %820 = vmatpush1.bf16.msra.mxu0 0
        %821 = vmatprep.subr.bf16.mxu0 0
        %822 = vmatpush1.bf16.msra.mxu0 0
        %823 = vmatprep.mubr.bf16.mxu0 0
        %824 = vmatmul.mubr.bf16.gmra.mrb[0].mxu0 %v780
        %v825 = vpop.f32.mrb[0].mxu0
        %v826 = vadd.f32 %v766, %v825
        %v827 = vpop.f32.mrb[0].mxu0
        %v828 = vpop.f32.mrb[0].mxu0
        %v829 = vadd.f32 %v766, %v828
        %v830 = vpop.f32.mrb[0].mxu0
        %831 = vmatprep.mubr.bf16.mxu0 0
        %832 = vmatmul.mubr.bf16.gmra.mrb[0].mxu0 %v783
        %v833 = vpop.f32.mrb[0].mxu0
        %v834 = vadd.f32 %v766, %v833
        %v835 = vpop.f32.mrb[0].mxu0
        %v836 = vpop.f32.mrb[0].mxu0
        %v837 = vadd.f32 %v766, %v836
        %v838 = vpop.f32.mrb[0].mxu0
        %839 = vmatprep.mubr.bf16.mxu0 0
        %840 = vmatmul.mubr.bf16.gmra.mrb[0].mxu0 %v786
        %v841 = vpop.f32.mrb[0].mxu0
        %v842 = vadd.f32 %v766, %v841
        %v843 = vpop.f32.mrb[0].mxu0
        %v844 = vpop.f32.mrb[0].mxu0
        %v845 = vadd.f32 %v766, %v844
        %v846 = vpop.f32.mrb[0].mxu0
        %847 = vmatprep.mubr.bf16.mxu0 0
        %848 = vmatmul.mubr.bf16.gmra.mrb[0].mxu0 %v789
        %v849 = vpop.f32.mrb[0].mxu0
        %v850 = vadd.f32 %v766, %v849
        %v851 = vpop.f32.mrb[0].mxu0
        %v852 = vpop.f32.mrb[0].mxu0
        %v853 = vadd.f32 %v766, %v852
        %v854 = vpop.f32.mrb[0].mxu0
        %855 = vdwg.mxu0
        %v856 = vsel %vm480, %v826, 0.0
        %v857 = vsel %vm480, %v829, 0.0
        %v858 = vadd.f32 %v856, %v857
        %v859 = vsel %vm480, %v834, 0.0
        %v860 = vadd.f32 %v858, %v859
        %v861 = vsel %vm480, %v837, 0.0
        %v862 = vadd.f32 %v860, %v861
        %v863 = vsel %vm480, %v842, 0.0
        %v864 = vadd.f32 %v862, %v863
        %v865 = vsel %vm480, %v845, 0.0
        %v866 = vadd.f32 %v864, %v865
        %v867 = vsel %vm480, %v850, 0.0
        %v868 = vadd.f32 %v866, %v867
        %v869 = vsel %vm480, %v853, 0.0
        %v870 = vadd.f32 %v868, %v869
        %v871 = vrot.slane %v870, 4
        %v872 = vadd.f32 %v870, %v871
        %v873 = vrot.slane %v872, 2
        %v874 = vadd.f32 %v872, %v873
        %v875 = vrot.slane %v874, 1
        %v876 = vadd.f32 %v874, %v875
        %v877 = vmul.f32 %v826, %v826
        %v878 = vmul.f32 %v829, %v829
        %v879 = vmul.f32 %v834, %v834
        %v880 = vmul.f32 %v837, %v837
        %v881 = vmul.f32 %v842, %v842
        %v882 = vmul.f32 %v845, %v845
        %v883 = vmul.f32 %v850, %v850
        %v884 = vmul.f32 %v853, %v853
        %v885 = vsel %vm480, %v877, 0.0
        %v886 = vsel %vm480, %v878, 0.0
        %v887 = vadd.f32 %v885, %v886
        %v888 = vsel %vm480, %v879, 0.0
        %v889 = vadd.f32 %v887, %v888
        %v890 = vsel %vm480, %v880, 0.0
        %v891 = vadd.f32 %v889, %v890
        %v892 = vsel %vm480, %v881, 0.0
        %v893 = vadd.f32 %v891, %v892
        %v894 = vsel %vm480, %v882, 0.0
        %v895 = vadd.f32 %v893, %v894
        %v896 = vsel %vm480, %v883, 0.0
        %v897 = vadd.f32 %v895, %v896
        %v898 = vsel %vm480, %v884, 0.0
        %v899 = vadd.f32 %v897, %v898
        %v900 = vrot.slane %v899, 4
        %v901 = vadd.f32 %v899, %v900
        %v902 = vrot.slane %v901, 2
        %v903 = vadd.f32 %v901, %v902
        %v904 = vrot.slane %v903, 1
        %v905 = vadd.f32 %v903, %v904
        %v906 = vmul.f32 %v876, 0.015625
        %v907 = vmul.f32 %v905, 0.015625
        %v908 = vmul.f32 %v906, %v906
        %v909 = vsub.f32 %v907, %v908
        %v910 = vmax.f32 %v909, 0.0
        %v911 = vadd.f32 %v910, 1e-05
        %v912 = vrsqrt.pop %v911
        %v913 = vmul.f32 %v752, %v912
        %v914 = vmul.f32 %v906, %v913
        %v915 = vsub.f32 %v753, %v914
        %v916 = vlaneseq
        %v917 = vshrl.u32 %v916, 7
        %v918 = vsub.s32 0, %v917
        %v919 = vrot.slane %v913, %v918
        %v920 = vmul.f32 %v826, %v919
        %v921 = vmul.f32 %v829, %v919
        %v922 = vmul.f32 %v834, %v919
        %v923 = vmul.f32 %v837, %v919
        %v924 = vmul.f32 %v842, %v919
        %v925 = vmul.f32 %v845, %v919
        %v926 = vmul.f32 %v850, %v919
        %v927 = vmul.f32 %v853, %v919
        %v928 = vlaneseq
        %v929 = vshrl.u32 %v928, 7
        %v930 = vsub.s32 0, %v929
        %v931 = vrot.slane %v915, %v930
        %v932 = vadd.f32 %v920, %v931
        %v933 = vadd.f32 %v921, %v931
        %v934 = vadd.f32 %v922, %v931
        %v935 = vadd.f32 %v923, %v931
        %v936 = vadd.f32 %v924, %v931
        %v937 = vadd.f32 %v925, %v931
        %v938 = vadd.f32 %v926, %v931
        %v939 = vadd.f32 %v927, %v931
        %v940 = vmax.f32 %v932, 0.0
        %v941 = vmax.f32 %v933, 0.0
        %v942 = vmax.f32 %v934, 0.0
        %v943 = vmax.f32 %v935, 0.0
        %v944 = vmax.f32 %v936, 0.0
        %v945 = vmax.f32 %v937, 0.0
        %v946 = vmax.f32 %v938, 0.0
        %v947 = vmax.f32 %v939, 0.0
        %v948 = vpack.c.bf16 %v941, %v940
        %v949 = vpack.c.bf16 %v943, %v942
        %v950 = vpack.c.bf16 %v945, %v944
        %v951 = vpack.c.bf16 %v947, %v946
        %v952 = vld [vmem:[%s2 + $0x28] sm:$0xf]
        %v953 = vld [vmem:[%s2 + $0x2c] sm:$0xf]
        %v954 = vld [vmem:[%s2 + $0x30] sm:$0xf]
        %v955 = vld [vmem:[%s2 + $0x34] sm:$0xf]
        %v956 = vlaneseq
        %v957 = vshrl.u32 %v956, 7
        %v958 = vsub.s32 0, %v957
        %v959 = vrot.slane %v754, %v958
        %v964 = vunpack.c.l.b16 %v952
        %v965 = vunpack.c.l.b16 %v953
        %v966 = vunpack.c.l.b16 %v954
        %v967 = vunpack.c.l.b16 %v955
        %v968 = vpack.c.b16 %v965, %v964
        %v969 = vpack.c.b16 %v967, %v966
        %v973 = vsel %vm480, %v948, 0
        %v976 = vsel %vm480, %v949, 0
        %v979 = vsel %vm480, %v950, 0
        %v982 = vsel %vm480, %v951, 0
        %984 = vmatprep.subr.bf16.mxu0 0
        %985 = vmatpush1.bf16.msra.mxu0 %v968
        %986 = vmatprep.subr.bf16.mxu0 0
        %987 = vmatpush1.bf16.msra.mxu0 %v969
        %988 = vmatprep.subr.bf16.mxu0 0
        %989 = vmatpush1.bf16.msra.mxu0 0
        %990 = vmatprep.subr.bf16.mxu0 0
        %991 = vmatpush1.bf16.msra.mxu0 0
        %992 = vmatprep.subr.bf16.mxu0 0
        %993 = vmatpush1.bf16.msra.mxu0 0
        %994 = vmatprep.subr.bf16.mxu0 0
        %995 = vmatpush1.bf16.msra.mxu0 0
        %996 = vmatprep.subr.bf16.mxu0 0
        %997 = vmatpush1.bf16.msra.mxu0 0
        %998 = vmatprep.subr.bf16.mxu0 0
        %999 = vmatpush1.bf16.msra.mxu0 0
        %1000 = vmatprep.subr.bf16.mxu0 0
        %1001 = vmatpush1.bf16.msra.mxu0 0
        %1002 = vmatprep.subr.bf16.mxu0 0
        %1003 = vmatpush1.bf16.msra.mxu0 0
        %1004 = vmatprep.subr.bf16.mxu0 0
        %1005 = vmatpush1.bf16.msra.mxu0 0
        %1006 = vmatprep.subr.bf16.mxu0 0
        %1007 = vmatpush1.bf16.msra.mxu0 0
        %1008 = vmatprep.subr.bf16.mxu0 0
        %1009 = vmatpush1.bf16.msra.mxu0 0
        %1010 = vmatprep.subr.bf16.mxu0 0
        %1011 = vmatpush1.bf16.msra.mxu0 0
        %1012 = vmatprep.subr.bf16.mxu0 0
        %1013 = vmatpush1.bf16.msra.mxu0 0
        %1014 = vmatprep.subr.bf16.mxu0 0
        %1015 = vmatpush1.bf16.msra.mxu0 0
        %1016 = vmatprep.mubr.bf16.mxu0 0
        %1017 = vmatmul.mubr.bf16.gmra.mrb[0].mxu0 %v973
        %v1018 = vpop.f32.mrb[0].mxu0
        %v1019 = vadd.f32 %v959, %v1018
        %v1020 = vpop.f32.mrb[0].mxu0
        %v1021 = vpop.f32.mrb[0].mxu0
        %v1022 = vadd.f32 %v959, %v1021
        %v1023 = vpop.f32.mrb[0].mxu0
        %1024 = vmatprep.mubr.bf16.mxu0 0
        %1025 = vmatmul.mubr.bf16.gmra.mrb[0].mxu0 %v976
        %v1026 = vpop.f32.mrb[0].mxu0
        %v1027 = vadd.f32 %v959, %v1026
        %v1028 = vpop.f32.mrb[0].mxu0
        %v1029 = vpop.f32.mrb[0].mxu0
        %v1030 = vadd.f32 %v959, %v1029
        %v1031 = vpop.f32.mrb[0].mxu0
        %1032 = vmatprep.mubr.bf16.mxu0 0
        %1033 = vmatmul.mubr.bf16.gmra.mrb[0].mxu0 %v979
        %v1034 = vpop.f32.mrb[0].mxu0
        %v1035 = vadd.f32 %v959, %v1034
        %v1036 = vpop.f32.mrb[0].mxu0
        %v1037 = vpop.f32.mrb[0].mxu0
        %v1038 = vadd.f32 %v959, %v1037
        %v1039 = vpop.f32.mrb[0].mxu0
        %1040 = vmatprep.mubr.bf16.mxu0 0
        %1041 = vmatmul.mubr.bf16.gmra.mrb[0].mxu0 %v982
        %v1042 = vpop.f32.mrb[0].mxu0
        %v1043 = vadd.f32 %v959, %v1042
        %v1044 = vpop.f32.mrb[0].mxu0
        %v1045 = vpop.f32.mrb[0].mxu0
        %v1046 = vadd.f32 %v959, %v1045
        %v1047 = vpop.f32.mrb[0].mxu0
        %1048 = vdwg.mxu0
        %v1049 = vmax.f32 %v1019, 0.0
        %v1050 = vmax.f32 %v1022, 0.0
        %v1051 = vmax.f32 %v1027, 0.0
        %v1052 = vmax.f32 %v1030, 0.0
        %v1053 = vmax.f32 %v1035, 0.0
        %v1054 = vmax.f32 %v1038, 0.0
        %v1055 = vmax.f32 %v1043, 0.0
        %v1056 = vmax.f32 %v1046, 0.0
        %v1057 = vpack.c.bf16 %v1050, %v1049
        %v1058 = vpack.c.bf16 %v1052, %v1051
        %v1059 = vpack.c.bf16 %v1054, %v1053
        %v1060 = vpack.c.bf16 %v1056, %v1055
        %1061 = vmatprep.subr.bf16.mxu0 0
        %1062 = vmatpush1.bf16.msra.mxu0 %v1057
        %1063 = vmatprep.subr.bf16.mxu0 0
        %1064 = vmatpush1.bf16.msra.mxu0 %v1058
        %1065 = vmatprep.subr.bf16.mxu0 0
        %1066 = vmatpush1.bf16.msra.mxu0 %v1059
        %1067 = vmatprep.subr.bf16.mxu0 0
        %1068 = vmatpush1.bf16.msra.mxu0 %v1060
        %1069 = vmatprep.subr.bf16.mxu0 0
        %1070 = vmatpush1.bf16.msra.mxu0 0
        %1071 = vmatprep.subr.bf16.mxu0 0
        %1072 = vmatpush1.bf16.msra.mxu0 0
        %1073 = vmatprep.subr.bf16.mxu0 0
        %1074 = vmatpush1.bf16.msra.mxu0 0
        %1075 = vmatprep.subr.bf16.mxu0 0
        %1076 = vmatpush1.bf16.msra.mxu0 0
        %1077 = vmatprep.subr.bf16.mxu0 0
        %1078 = vmatpush1.bf16.msra.mxu0 0
        %1079 = vmatprep.subr.bf16.mxu0 0
        %1080 = vmatpush1.bf16.msra.mxu0 0
        %1081 = vmatprep.subr.bf16.mxu0 0
        %1082 = vmatpush1.bf16.msra.mxu0 0
        %1083 = vmatprep.subr.bf16.mxu0 0
        %1084 = vmatpush1.bf16.msra.mxu0 0
        %1085 = vmatprep.subr.bf16.mxu0 0
        %1086 = vmatpush1.bf16.msra.mxu0 0
        %1087 = vmatprep.subr.bf16.mxu0 0
        %1088 = vmatpush1.bf16.msra.mxu0 0
        %1089 = vmatprep.subr.bf16.mxu0 0
        %1090 = vmatpush1.bf16.msra.mxu0 0
        %1091 = vmatprep.subr.bf16.mxu0 0
        %1092 = vmatpush1.bf16.msra.mxu0 0
        %1093 = vmatprep.mubr.bf16.mxu0 0
        %1094 = vmatmul.mubr.bf16.gmra.mrb[0].mxu0 %v306
        %v1095 = vpop.f32.mrb[0].mxu0
        %v1096 = vadd.f32 0.0, %v1095
        %v1097 = vpop.f32.mrb[0].mxu0
        %v1098 = vpop.f32.mrb[0].mxu0
        %v1099 = vadd.f32 0.0, %v1098
        %v1100 = vpop.f32.mrb[0].mxu0
        %1101 = vmatprep.mubr.bf16.mxu0 0
        %1102 = vmatmul.mubr.bf16.gmra.mrb[0].mxu0 %v309
        %v1103 = vpop.f32.mrb[0].mxu0
        %v1104 = vadd.f32 0.0, %v1103
        %v1105 = vpop.f32.mrb[0].mxu0
        %v1106 = vpop.f32.mrb[0].mxu0
        %v1107 = vadd.f32 0.0, %v1106
        %v1108 = vpop.f32.mrb[0].mxu0
        %1109 = vmatprep.mubr.bf16.mxu0 0
        %1110 = vmatmul.mubr.bf16.gmra.mrb[0].mxu0 %v312
        %v1111 = vpop.f32.mrb[0].mxu0
        %v1112 = vadd.f32 0.0, %v1111
        %v1113 = vpop.f32.mrb[0].mxu0
        %v1114 = vpop.f32.mrb[0].mxu0
        %v1115 = vadd.f32 0.0, %v1114
        %v1116 = vpop.f32.mrb[0].mxu0
        %1117 = vmatprep.mubr.bf16.mxu0 0
        %1118 = vmatmul.mubr.bf16.gmra.mrb[0].mxu0 %v315
        %v1119 = vpop.f32.mrb[0].mxu0
        %v1120 = vadd.f32 0.0, %v1119
        %v1121 = vpop.f32.mrb[0].mxu0
        %v1122 = vpop.f32.mrb[0].mxu0
        %v1123 = vadd.f32 0.0, %v1122
        %v1124 = vpop.f32.mrb[0].mxu0
        %1125 = vdwg.mxu0
        %v1126 = vld [vmem:[%s4 + $0x8] sm:$0x1]
        %v1127 = vld [vmem:[%s4 + $0x9] sm:$0x1]
        %v1128 = vld [vmem:[%s4 + $0xa] sm:$0x1]
        %v1129 = vld [vmem:[%s4 + $0xb] sm:$0x1]
        %v1130 = vpack.c.bf16 %v1099, %v1096
        %v1131 = vpack.c.bf16 %v1107, %v1104
        %v1132 = vpack.c.bf16 %v1115, %v1112
        %v1133 = vpack.c.bf16 %v1123, %v1120
        %v1134 = vld [vmem:[%s2 + $0x38] sm:$0xf]
        %v1135 = vld [vmem:[%s2 + $0x3c] sm:$0xf]
        %v1136 = vld [vmem:[%s2 + $0x40] sm:$0xf]
        %v1137 = vld [vmem:[%s2 + $0x44] sm:$0xf]
        %v1138 = vlaneseq
        %v1139 = vshrl.u32 %v1138, 7
        %v1140 = vsub.s32 0, %v1139
        %v1141 = vrot.slane %v1126, %v1140
        %v1146 = vunpack.c.l.b16 %v1134
        %v1147 = vunpack.c.l.b16 %v1135
        %v1148 = vunpack.c.l.b16 %v1136
        %v1149 = vunpack.c.l.b16 %v1137
        %v1150 = vpack.c.b16 %v1147, %v1146
        %v1151 = vpack.c.b16 %v1149, %v1148
        %v1155 = vsel %vm480, %v1130, 0
        %v1158 = vsel %vm480, %v1131, 0
        %v1161 = vsel %vm480, %v1132, 0
        %v1164 = vsel %vm480, %v1133, 0
        %1166 = vmatprep.subr.bf16.mxu0 0
        %1167 = vmatpush1.bf16.msra.mxu0 %v1150
        %1168 = vmatprep.subr.bf16.mxu0 0
        %1169 = vmatpush1.bf16.msra.mxu0 %v1151
        %1170 = vmatprep.subr.bf16.mxu0 0
        %1171 = vmatpush1.bf16.msra.mxu0 0
        %1172 = vmatprep.subr.bf16.mxu0 0
        %1173 = vmatpush1.bf16.msra.mxu0 0
        %1174 = vmatprep.subr.bf16.mxu0 0
        %1175 = vmatpush1.bf16.msra.mxu0 0
        %1176 = vmatprep.subr.bf16.mxu0 0
        %1177 = vmatpush1.bf16.msra.mxu0 0
        %1178 = vmatprep.subr.bf16.mxu0 0
        %1179 = vmatpush1.bf16.msra.mxu0 0
        %1180 = vmatprep.subr.bf16.mxu0 0
        %1181 = vmatpush1.bf16.msra.mxu0 0
        %1182 = vmatprep.subr.bf16.mxu0 0
        %1183 = vmatpush1.bf16.msra.mxu0 0
        %1184 = vmatprep.subr.bf16.mxu0 0
        %1185 = vmatpush1.bf16.msra.mxu0 0
        %1186 = vmatprep.subr.bf16.mxu0 0
        %1187 = vmatpush1.bf16.msra.mxu0 0
        %1188 = vmatprep.subr.bf16.mxu0 0
        %1189 = vmatpush1.bf16.msra.mxu0 0
        %1190 = vmatprep.subr.bf16.mxu0 0
        %1191 = vmatpush1.bf16.msra.mxu0 0
        %1192 = vmatprep.subr.bf16.mxu0 0
        %1193 = vmatpush1.bf16.msra.mxu0 0
        %1194 = vmatprep.subr.bf16.mxu0 0
        %1195 = vmatpush1.bf16.msra.mxu0 0
        %1196 = vmatprep.subr.bf16.mxu0 0
        %1197 = vmatpush1.bf16.msra.mxu0 0
        %1198 = vmatprep.mubr.bf16.mxu0 0
        %1199 = vmatmul.mubr.bf16.gmra.mrb[0].mxu0 %v1155
        %v1200 = vpop.f32.mrb[0].mxu0
        %v1201 = vadd.f32 %v1141, %v1200
        %v1202 = vpop.f32.mrb[0].mxu0
        %v1203 = vpop.f32.mrb[0].mxu0
        %v1204 = vadd.f32 %v1141, %v1203
        %v1205 = vpop.f32.mrb[0].mxu0
        %1206 = vmatprep.mubr.bf16.mxu0 0
        %1207 = vmatmul.mubr.bf16.gmra.mrb[0].mxu0 %v1158
        %v1208 = vpop.f32.mrb[0].mxu0
        %v1209 = vadd.f32 %v1141, %v1208
        %v1210 = vpop.f32.mrb[0].mxu0
        %v1211 = vpop.f32.mrb[0].mxu0
        %v1212 = vadd.f32 %v1141, %v1211
        %v1213 = vpop.f32.mrb[0].mxu0
        %1214 = vmatprep.mubr.bf16.mxu0 0
        %1215 = vmatmul.mubr.bf16.gmra.mrb[0].mxu0 %v1161
        %v1216 = vpop.f32.mrb[0].mxu0
        %v1217 = vadd.f32 %v1141, %v1216
        %v1218 = vpop.f32.mrb[0].mxu0
        %v1219 = vpop.f32.mrb[0].mxu0
        %v1220 = vadd.f32 %v1141, %v1219
        %v1221 = vpop.f32.mrb[0].mxu0
        %1222 = vmatprep.mubr.bf16.mxu0 0
        %1223 = vmatmul.mubr.bf16.gmra.mrb[0].mxu0 %v1164
        %v1224 = vpop.f32.mrb[0].mxu0
        %v1225 = vadd.f32 %v1141, %v1224
        %v1226 = vpop.f32.mrb[0].mxu0
        %v1227 = vpop.f32.mrb[0].mxu0
        %v1228 = vadd.f32 %v1141, %v1227
        %v1229 = vpop.f32.mrb[0].mxu0
        %1230 = vdwg.mxu0
        %v1231 = vsel %vm480, %v1201, 0.0
        %v1232 = vsel %vm480, %v1204, 0.0
        %v1233 = vadd.f32 %v1231, %v1232
        %v1234 = vsel %vm480, %v1209, 0.0
        %v1235 = vadd.f32 %v1233, %v1234
        %v1236 = vsel %vm480, %v1212, 0.0
        %v1237 = vadd.f32 %v1235, %v1236
        %v1238 = vsel %vm480, %v1217, 0.0
        %v1239 = vadd.f32 %v1237, %v1238
        %v1240 = vsel %vm480, %v1220, 0.0
        %v1241 = vadd.f32 %v1239, %v1240
        %v1242 = vsel %vm480, %v1225, 0.0
        %v1243 = vadd.f32 %v1241, %v1242
        %v1244 = vsel %vm480, %v1228, 0.0
        %v1245 = vadd.f32 %v1243, %v1244
        %v1246 = vrot.slane %v1245, 4
        %v1247 = vadd.f32 %v1245, %v1246
        %v1248 = vrot.slane %v1247, 2
        %v1249 = vadd.f32 %v1247, %v1248
        %v1250 = vrot.slane %v1249, 1
        %v1251 = vadd.f32 %v1249, %v1250
        %v1252 = vmul.f32 %v1201, %v1201
        %v1253 = vmul.f32 %v1204, %v1204
        %v1254 = vmul.f32 %v1209, %v1209
        %v1255 = vmul.f32 %v1212, %v1212
        %v1256 = vmul.f32 %v1217, %v1217
        %v1257 = vmul.f32 %v1220, %v1220
        %v1258 = vmul.f32 %v1225, %v1225
        %v1259 = vmul.f32 %v1228, %v1228
        %v1260 = vsel %vm480, %v1252, 0.0
        %v1261 = vsel %vm480, %v1253, 0.0
        %v1262 = vadd.f32 %v1260, %v1261
        %v1263 = vsel %vm480, %v1254, 0.0
        %v1264 = vadd.f32 %v1262, %v1263
        %v1265 = vsel %vm480, %v1255, 0.0
        %v1266 = vadd.f32 %v1264, %v1265
        %v1267 = vsel %vm480, %v1256, 0.0
        %v1268 = vadd.f32 %v1266, %v1267
        %v1269 = vsel %vm480, %v1257, 0.0
        %v1270 = vadd.f32 %v1268, %v1269
        %v1271 = vsel %vm480, %v1258, 0.0
        %v1272 = vadd.f32 %v1270, %v1271
        %v1273 = vsel %vm480, %v1259, 0.0
        %v1274 = vadd.f32 %v1272, %v1273
        %v1275 = vrot.slane %v1274, 4
        %v1276 = vadd.f32 %v1274, %v1275
        %v1277 = vrot.slane %v1276, 2
        %v1278 = vadd.f32 %v1276, %v1277
        %v1279 = vrot.slane %v1278, 1
        %v1280 = vadd.f32 %v1278, %v1279
        %v1281 = vmul.f32 %v1251, 0.015625
        %v1282 = vmul.f32 %v1280, 0.015625
        %v1283 = vmul.f32 %v1281, %v1281
        %v1284 = vsub.f32 %v1282, %v1283
        %v1285 = vmax.f32 %v1284, 0.0
        %v1286 = vadd.f32 %v1285, 1e-05
        %v1287 = vrsqrt.pop %v1286
        %v1288 = vmul.f32 %v1127, %v1287
        %v1289 = vmul.f32 %v1281, %v1288
        %v1290 = vsub.f32 %v1128, %v1289
        %v1291 = vlaneseq
        %v1292 = vshrl.u32 %v1291, 7
        %v1293 = vsub.s32 0, %v1292
        %v1294 = vrot.slane %v1288, %v1293
        %v1295 = vmul.f32 %v1201, %v1294
        %v1296 = vmul.f32 %v1204, %v1294
        %v1297 = vmul.f32 %v1209, %v1294
        %v1298 = vmul.f32 %v1212, %v1294
        %v1299 = vmul.f32 %v1217, %v1294
        %v1300 = vmul.f32 %v1220, %v1294
        %v1301 = vmul.f32 %v1225, %v1294
        %v1302 = vmul.f32 %v1228, %v1294
        %v1303 = vlaneseq
        %v1304 = vshrl.u32 %v1303, 7
        %v1305 = vsub.s32 0, %v1304
        %v1306 = vrot.slane %v1290, %v1305
        %v1307 = vadd.f32 %v1295, %v1306
        %v1308 = vadd.f32 %v1296, %v1306
        %v1309 = vadd.f32 %v1297, %v1306
        %v1310 = vadd.f32 %v1298, %v1306
        %v1311 = vadd.f32 %v1299, %v1306
        %v1312 = vadd.f32 %v1300, %v1306
        %v1313 = vadd.f32 %v1301, %v1306
        %v1314 = vadd.f32 %v1302, %v1306
        %v1315 = vmax.f32 %v1307, 0.0
        %v1316 = vmax.f32 %v1308, 0.0
        %v1317 = vmax.f32 %v1309, 0.0
        %v1318 = vmax.f32 %v1310, 0.0
        %v1319 = vmax.f32 %v1311, 0.0
        %v1320 = vmax.f32 %v1312, 0.0
        %v1321 = vmax.f32 %v1313, 0.0
        %v1322 = vmax.f32 %v1314, 0.0
        %v1323 = vpack.c.bf16 %v1316, %v1315
        %v1324 = vpack.c.bf16 %v1318, %v1317
        %v1325 = vpack.c.bf16 %v1320, %v1319
        %v1326 = vpack.c.bf16 %v1322, %v1321
        %v1327 = vld [vmem:[%s2 + $0x48] sm:$0xf]
        %v1328 = vld [vmem:[%s2 + $0x4c] sm:$0xf]
        %v1329 = vld [vmem:[%s2 + $0x50] sm:$0xf]
        %v1330 = vld [vmem:[%s2 + $0x54] sm:$0xf]
        %v1331 = vlaneseq
        %v1332 = vshrl.u32 %v1331, 7
        %v1333 = vsub.s32 0, %v1332
        %v1334 = vrot.slane %v1129, %v1333
        %v1339 = vunpack.c.l.b16 %v1327
        %v1340 = vunpack.c.l.b16 %v1328
        %v1341 = vunpack.c.l.b16 %v1329
        %v1342 = vunpack.c.l.b16 %v1330
        %v1343 = vpack.c.b16 %v1340, %v1339
        %v1344 = vpack.c.b16 %v1342, %v1341
        %v1348 = vsel %vm480, %v1323, 0
        %v1351 = vsel %vm480, %v1324, 0
        %v1354 = vsel %vm480, %v1325, 0
        %v1357 = vsel %vm480, %v1326, 0
        %1359 = vmatprep.subr.bf16.mxu0 0
        %1360 = vmatpush1.bf16.msra.mxu0 %v1343
        %1361 = vmatprep.subr.bf16.mxu0 0
        %1362 = vmatpush1.bf16.msra.mxu0 %v1344
        %1363 = vmatprep.subr.bf16.mxu0 0
        %1364 = vmatpush1.bf16.msra.mxu0 0
        %1365 = vmatprep.subr.bf16.mxu0 0
        %1366 = vmatpush1.bf16.msra.mxu0 0
        %1367 = vmatprep.subr.bf16.mxu0 0
        %1368 = vmatpush1.bf16.msra.mxu0 0
        %1369 = vmatprep.subr.bf16.mxu0 0
        %1370 = vmatpush1.bf16.msra.mxu0 0
        %1371 = vmatprep.subr.bf16.mxu0 0
        %1372 = vmatpush1.bf16.msra.mxu0 0
        %1373 = vmatprep.subr.bf16.mxu0 0
        %1374 = vmatpush1.bf16.msra.mxu0 0
        %1375 = vmatprep.subr.bf16.mxu0 0
        %1376 = vmatpush1.bf16.msra.mxu0 0
        %1377 = vmatprep.subr.bf16.mxu0 0
        %1378 = vmatpush1.bf16.msra.mxu0 0
        %1379 = vmatprep.subr.bf16.mxu0 0
        %1380 = vmatpush1.bf16.msra.mxu0 0
        %1381 = vmatprep.subr.bf16.mxu0 0
        %1382 = vmatpush1.bf16.msra.mxu0 0
        %1383 = vmatprep.subr.bf16.mxu0 0
        %1384 = vmatpush1.bf16.msra.mxu0 0
        %1385 = vmatprep.subr.bf16.mxu0 0
        %1386 = vmatpush1.bf16.msra.mxu0 0
        %1387 = vmatprep.subr.bf16.mxu0 0
        %1388 = vmatpush1.bf16.msra.mxu0 0
        %1389 = vmatprep.subr.bf16.mxu0 0
        %1390 = vmatpush1.bf16.msra.mxu0 0
        %1391 = vmatprep.mubr.bf16.mxu0 0
        %1392 = vmatmul.mubr.bf16.gmra.mrb[0].mxu0 %v1348
        %v1393 = vpop.f32.mrb[0].mxu0
        %v1394 = vadd.f32 %v1334, %v1393
        %v1395 = vpop.f32.mrb[0].mxu0
        %v1396 = vpop.f32.mrb[0].mxu0
        %v1397 = vadd.f32 %v1334, %v1396
        %v1398 = vpop.f32.mrb[0].mxu0
        %1399 = vmatprep.mubr.bf16.mxu0 0
        %1400 = vmatmul.mubr.bf16.gmra.mrb[0].mxu0 %v1351
        %v1401 = vpop.f32.mrb[0].mxu0
        %v1402 = vadd.f32 %v1334, %v1401
        %v1403 = vpop.f32.mrb[0].mxu0
        %v1404 = vpop.f32.mrb[0].mxu0
        %v1405 = vadd.f32 %v1334, %v1404
        %v1406 = vpop.f32.mrb[0].mxu0
        %1407 = vmatprep.mubr.bf16.mxu0 0
        %1408 = vmatmul.mubr.bf16.gmra.mrb[0].mxu0 %v1354
        %v1409 = vpop.f32.mrb[0].mxu0
        %v1410 = vadd.f32 %v1334, %v1409
        %v1411 = vpop.f32.mrb[0].mxu0
        %v1412 = vpop.f32.mrb[0].mxu0
        %v1413 = vadd.f32 %v1334, %v1412
        %v1414 = vpop.f32.mrb[0].mxu0
        %1415 = vmatprep.mubr.bf16.mxu0 0
        %1416 = vmatmul.mubr.bf16.gmra.mrb[0].mxu0 %v1357
        %v1417 = vpop.f32.mrb[0].mxu0
        %v1418 = vadd.f32 %v1334, %v1417
        %v1419 = vpop.f32.mrb[0].mxu0
        %v1420 = vpop.f32.mrb[0].mxu0
        %v1421 = vadd.f32 %v1334, %v1420
        %v1422 = vpop.f32.mrb[0].mxu0
        %1423 = vdwg.mxu0
        %v1424 = vmax.f32 %v1394, 0.0
        %v1425 = vmax.f32 %v1397, 0.0
        %v1426 = vmax.f32 %v1402, 0.0
        %v1427 = vmax.f32 %v1405, 0.0
        %v1428 = vmax.f32 %v1410, 0.0
        %v1429 = vmax.f32 %v1413, 0.0
        %v1430 = vmax.f32 %v1418, 0.0
        %v1431 = vmax.f32 %v1421, 0.0
        %v1432 = vpack.c.bf16 %v1425, %v1424
        %v1433 = vpack.c.bf16 %v1427, %v1426
        %v1434 = vpack.c.bf16 %v1429, %v1428
        %v1435 = vpack.c.bf16 %v1431, %v1430
        %v1436 = vld [vmem:[%s4 + $0xc] sm:$0x1]
        %v1437 = vld [vmem:[%s3] sm:$0xf]
        %v1438 = vld [vmem:[%s3 + $0x4] sm:$0xf]
        %v1439 = vld [vmem:[%s3 + $0x8] sm:$0xf]
        %v1440 = vld [vmem:[%s3 + $0xc] sm:$0xf]
        %v1441 = vld [vmem:[%s3 + $0x10] sm:$0xf]
        %v1442 = vld [vmem:[%s3 + $0x14] sm:$0xf]
        %v1443 = vld [vmem:[%s3 + $0x18] sm:$0xf]
        %v1444 = vld [vmem:[%s3 + $0x1c] sm:$0xf]
        %v1449 = vunpack.c.l.b16 %v1441
        %v1450 = vunpack.c.l.b16 %v1442
        %v1451 = vunpack.c.l.b16 %v1443
        %v1452 = vunpack.c.l.b16 %v1444
        %v1453 = vpack.c.b16 %v1450, %v1449
        %v1454 = vpack.c.b16 %v1452, %v1451
        %v1458 = vsel %vm480, %v1057, 0
        %v1461 = vsel %vm480, %v1058, 0
        %v1464 = vsel %vm480, %v1059, 0
        %v1467 = vsel %vm480, %v1060, 0
        %1469 = vmatprep.subr.bf16.mxu0 0
        %1470 = vmatpush1.bf16.msra.mxu0 %v1453
        %1471 = vmatprep.subr.bf16.mxu0 0
        %1472 = vmatpush1.bf16.msra.mxu0 %v1454
        %1473 = vmatprep.subr.bf16.mxu0 0
        %1474 = vmatpush1.bf16.msra.mxu0 0
        %1475 = vmatprep.subr.bf16.mxu0 0
        %1476 = vmatpush1.bf16.msra.mxu0 0
        %1477 = vmatprep.subr.bf16.mxu0 0
        %1478 = vmatpush1.bf16.msra.mxu0 0
        %1479 = vmatprep.subr.bf16.mxu0 0
        %1480 = vmatpush1.bf16.msra.mxu0 0
        %1481 = vmatprep.subr.bf16.mxu0 0
        %1482 = vmatpush1.bf16.msra.mxu0 0
        %1483 = vmatprep.subr.bf16.mxu0 0
        %1484 = vmatpush1.bf16.msra.mxu0 0
        %1485 = vmatprep.subr.bf16.mxu0 0
        %1486 = vmatpush1.bf16.msra.mxu0 0
        %1487 = vmatprep.subr.bf16.mxu0 0
        %1488 = vmatpush1.bf16.msra.mxu0 0
        %1489 = vmatprep.subr.bf16.mxu0 0
        %1490 = vmatpush1.bf16.msra.mxu0 0
        %1491 = vmatprep.subr.bf16.mxu0 0
        %1492 = vmatpush1.bf16.msra.mxu0 0
        %1493 = vmatprep.subr.bf16.mxu0 0
        %1494 = vmatpush1.bf16.msra.mxu0 0
        %1495 = vmatprep.subr.bf16.mxu0 0
        %1496 = vmatpush1.bf16.msra.mxu0 0
        %1497 = vmatprep.subr.bf16.mxu0 0
        %1498 = vmatpush1.bf16.msra.mxu0 0
        %1499 = vmatprep.subr.bf16.mxu0 0
        %1500 = vmatpush1.bf16.msra.mxu0 0
        %1501 = vmatprep.mubr.bf16.mxu0 0
        %1502 = vmatmul.mubr.bf16.gmra.mrb[0].mxu0 %v1458
        %v1503 = vpop.f32.mrb[0].mxu0
        %v1504 = vadd.f32 0.0, %v1503
        %v1505 = vpop.f32.mrb[0].mxu0
        %v1506 = vpop.f32.mrb[0].mxu0
        %v1507 = vadd.f32 0.0, %v1506
        %v1508 = vpop.f32.mrb[0].mxu0
        %1509 = vmatprep.mubr.bf16.mxu0 0
        %1510 = vmatmul.mubr.bf16.gmra.mrb[0].mxu0 %v1461
        %v1511 = vpop.f32.mrb[0].mxu0
        %v1512 = vadd.f32 0.0, %v1511
        %v1513 = vpop.f32.mrb[0].mxu0
        %v1514 = vpop.f32.mrb[0].mxu0
        %v1515 = vadd.f32 0.0, %v1514
        %v1516 = vpop.f32.mrb[0].mxu0
        %1517 = vmatprep.mubr.bf16.mxu0 0
        %1518 = vmatmul.mubr.bf16.gmra.mrb[0].mxu0 %v1464
        %v1519 = vpop.f32.mrb[0].mxu0
        %v1520 = vadd.f32 0.0, %v1519
        %v1521 = vpop.f32.mrb[0].mxu0
        %v1522 = vpop.f32.mrb[0].mxu0
        %v1523 = vadd.f32 0.0, %v1522
        %v1524 = vpop.f32.mrb[0].mxu0
        %1525 = vmatprep.mubr.bf16.mxu0 0
        %1526 = vmatmul.mubr.bf16.gmra.mrb[0].mxu0 %v1467
        %v1527 = vpop.f32.mrb[0].mxu0
        %v1528 = vadd.f32 0.0, %v1527
        %v1529 = vpop.f32.mrb[0].mxu0
        %v1530 = vpop.f32.mrb[0].mxu0
        %v1531 = vadd.f32 0.0, %v1530
        %v1532 = vpop.f32.mrb[0].mxu0
        %1533 = vdwg.mxu0
        %v1538 = vunpack.c.l.b16 %v1437
        %v1539 = vunpack.c.l.b16 %v1438
        %v1540 = vunpack.c.l.b16 %v1439
        %v1541 = vunpack.c.l.b16 %v1440
        %v1542 = vpack.c.b16 %v1539, %v1538
        %v1543 = vpack.c.b16 %v1541, %v1540
        %v1547 = vsel %vm480, %v682, 0
        %v1550 = vsel %vm480, %v683, 0
        %v1553 = vsel %vm480, %v684, 0
        %v1556 = vsel %vm480, %v685, 0
        %1558 = vmatprep.subr.bf16.mxu0 0
        %1559 = vmatpush1.bf16.msra.mxu0 %v1542
        %1560 = vmatprep.subr.bf16.mxu0 0
        %1561 = vmatpush1.bf16.msra.mxu0 %v1543
        %1562 = vmatprep.subr.bf16.mxu0 0
        %1563 = vmatpush1.bf16.msra.mxu0 0
        %1564 = vmatprep.subr.bf16.mxu0 0
        %1565 = vmatpush1.bf16.msra.mxu0 0
        %1566 = vmatprep.subr.bf16.mxu0 0
        %1567 = vmatpush1.bf16.msra.mxu0 0
        %1568 = vmatprep.subr.bf16.mxu0 0
        %1569 = vmatpush1.bf16.msra.mxu0 0
        %1570 = vmatprep.subr.bf16.mxu0 0
        %1571 = vmatpush1.bf16.msra.mxu0 0
        %1572 = vmatprep.subr.bf16.mxu0 0
        %1573 = vmatpush1.bf16.msra.mxu0 0
        %1574 = vmatprep.subr.bf16.mxu0 0
        %1575 = vmatpush1.bf16.msra.mxu0 0
        %1576 = vmatprep.subr.bf16.mxu0 0
        %1577 = vmatpush1.bf16.msra.mxu0 0
        %1578 = vmatprep.subr.bf16.mxu0 0
        %1579 = vmatpush1.bf16.msra.mxu0 0
        %1580 = vmatprep.subr.bf16.mxu0 0
        %1581 = vmatpush1.bf16.msra.mxu0 0
        %1582 = vmatprep.subr.bf16.mxu0 0
        %1583 = vmatpush1.bf16.msra.mxu0 0
        %1584 = vmatprep.subr.bf16.mxu0 0
        %1585 = vmatpush1.bf16.msra.mxu0 0
        %1586 = vmatprep.subr.bf16.mxu0 0
        %1587 = vmatpush1.bf16.msra.mxu0 0
        %1588 = vmatprep.subr.bf16.mxu0 0
        %1589 = vmatpush1.bf16.msra.mxu0 0
        %1590 = vmatprep.mubr.bf16.mxu0 0
        %1591 = vmatmul.mubr.bf16.gmra.mrb[0].mxu0 %v1547
        %v1592 = vpop.f32.mrb[0].mxu0
        %v1593 = vadd.f32 %v1504, %v1592
        %v1594 = vpop.f32.mrb[0].mxu0
        %v1595 = vpop.f32.mrb[0].mxu0
        %v1596 = vadd.f32 %v1507, %v1595
        %v1597 = vpop.f32.mrb[0].mxu0
        %1598 = vmatprep.mubr.bf16.mxu0 0
        %1599 = vmatmul.mubr.bf16.gmra.mrb[0].mxu0 %v1550
        %v1600 = vpop.f32.mrb[0].mxu0
        %v1601 = vadd.f32 %v1512, %v1600
        %v1602 = vpop.f32.mrb[0].mxu0
        %v1603 = vpop.f32.mrb[0].mxu0
        %v1604 = vadd.f32 %v1515, %v1603
        %v1605 = vpop.f32.mrb[0].mxu0
        %1606 = vmatprep.mubr.bf16.mxu0 0
        %1607 = vmatmul.mubr.bf16.gmra.mrb[0].mxu0 %v1553
        %v1608 = vpop.f32.mrb[0].mxu0
        %v1609 = vadd.f32 %v1520, %v1608
        %v1610 = vpop.f32.mrb[0].mxu0
        %v1611 = vpop.f32.mrb[0].mxu0
        %v1612 = vadd.f32 %v1523, %v1611
        %v1613 = vpop.f32.mrb[0].mxu0
        %1614 = vmatprep.mubr.bf16.mxu0 0
        %1615 = vmatmul.mubr.bf16.gmra.mrb[0].mxu0 %v1556
        %v1616 = vpop.f32.mrb[0].mxu0
        %v1617 = vadd.f32 %v1528, %v1616
        %v1618 = vpop.f32.mrb[0].mxu0
        %v1619 = vpop.f32.mrb[0].mxu0
        %v1620 = vadd.f32 %v1531, %v1619
        %v1621 = vpop.f32.mrb[0].mxu0
        %1622 = vdwg.mxu0
        %v1623 = vld [vmem:[%s3 + $0x20] sm:$0xf]
        %v1624 = vld [vmem:[%s3 + $0x24] sm:$0xf]
        %v1625 = vld [vmem:[%s3 + $0x28] sm:$0xf]
        %v1626 = vld [vmem:[%s3 + $0x2c] sm:$0xf]
        %v1631 = vunpack.c.l.b16 %v1623
        %v1632 = vunpack.c.l.b16 %v1624
        %v1633 = vunpack.c.l.b16 %v1625
        %v1634 = vunpack.c.l.b16 %v1626
        %v1635 = vpack.c.b16 %v1632, %v1631
        %v1636 = vpack.c.b16 %v1634, %v1633
        %v1640 = vsel %vm480, %v1432, 0
        %v1643 = vsel %vm480, %v1433, 0
        %v1646 = vsel %vm480, %v1434, 0
        %v1649 = vsel %vm480, %v1435, 0
        %1651 = vmatprep.subr.bf16.mxu0 0
        %1652 = vmatpush1.bf16.msra.mxu0 %v1635
        %1653 = vmatprep.subr.bf16.mxu0 0
        %1654 = vmatpush1.bf16.msra.mxu0 %v1636
        %1655 = vmatprep.subr.bf16.mxu0 0
        %1656 = vmatpush1.bf16.msra.mxu0 0
        %1657 = vmatprep.subr.bf16.mxu0 0
        %1658 = vmatpush1.bf16.msra.mxu0 0
        %1659 = vmatprep.subr.bf16.mxu0 0
        %1660 = vmatpush1.bf16.msra.mxu0 0
        %1661 = vmatprep.subr.bf16.mxu0 0
        %1662 = vmatpush1.bf16.msra.mxu0 0
        %1663 = vmatprep.subr.bf16.mxu0 0
        %1664 = vmatpush1.bf16.msra.mxu0 0
        %1665 = vmatprep.subr.bf16.mxu0 0
        %1666 = vmatpush1.bf16.msra.mxu0 0
        %1667 = vmatprep.subr.bf16.mxu0 0
        %1668 = vmatpush1.bf16.msra.mxu0 0
        %1669 = vmatprep.subr.bf16.mxu0 0
        %1670 = vmatpush1.bf16.msra.mxu0 0
        %1671 = vmatprep.subr.bf16.mxu0 0
        %1672 = vmatpush1.bf16.msra.mxu0 0
        %1673 = vmatprep.subr.bf16.mxu0 0
        %1674 = vmatpush1.bf16.msra.mxu0 0
        %1675 = vmatprep.subr.bf16.mxu0 0
        %1676 = vmatpush1.bf16.msra.mxu0 0
        %1677 = vmatprep.subr.bf16.mxu0 0
        %1678 = vmatpush1.bf16.msra.mxu0 0
        %1679 = vmatprep.subr.bf16.mxu0 0
        %1680 = vmatpush1.bf16.msra.mxu0 0
        %1681 = vmatprep.subr.bf16.mxu0 0
        %1682 = vmatpush1.bf16.msra.mxu0 0
        %1683 = vmatprep.mubr.bf16.mxu0 0
        %1684 = vmatmul.mubr.bf16.gmra.mrb[0].mxu0 %v1640
        %v1685 = vpop.f32.mrb[0].mxu0
        %v1686 = vadd.f32 0.0, %v1685
        %v1687 = vpop.f32.mrb[0].mxu0
        %v1688 = vpop.f32.mrb[0].mxu0
        %v1689 = vadd.f32 0.0, %v1688
        %v1690 = vpop.f32.mrb[0].mxu0
        %1691 = vmatprep.mubr.bf16.mxu0 0
        %1692 = vmatmul.mubr.bf16.gmra.mrb[0].mxu0 %v1643
        %v1693 = vpop.f32.mrb[0].mxu0
        %v1694 = vadd.f32 0.0, %v1693
        %v1695 = vpop.f32.mrb[0].mxu0
        %v1696 = vpop.f32.mrb[0].mxu0
        %v1697 = vadd.f32 0.0, %v1696
        %v1698 = vpop.f32.mrb[0].mxu0
        %1699 = vmatprep.mubr.bf16.mxu0 0
        %1700 = vmatmul.mubr.bf16.gmra.mrb[0].mxu0 %v1646
        %v1701 = vpop.f32.mrb[0].mxu0
        %v1702 = vadd.f32 0.0, %v1701
        %v1703 = vpop.f32.mrb[0].mxu0
        %v1704 = vpop.f32.mrb[0].mxu0
        %v1705 = vadd.f32 0.0, %v1704
        %v1706 = vpop.f32.mrb[0].mxu0
        %1707 = vmatprep.mubr.bf16.mxu0 0
        %1708 = vmatmul.mubr.bf16.gmra.mrb[0].mxu0 %v1649
        %v1709 = vpop.f32.mrb[0].mxu0
        %v1710 = vadd.f32 0.0, %v1709
        %v1711 = vpop.f32.mrb[0].mxu0
        %v1712 = vpop.f32.mrb[0].mxu0
        %v1713 = vadd.f32 0.0, %v1712
        %v1714 = vpop.f32.mrb[0].mxu0
        %1715 = vdwg.mxu0
        %v1716 = vadd.f32 %v1593, %v1686
        %v1717 = vadd.f32 %v1596, %v1689
        %v1718 = vadd.f32 %v1601, %v1694
        %v1719 = vadd.f32 %v1604, %v1697
        %v1720 = vadd.f32 %v1609, %v1702
        %v1721 = vadd.f32 %v1612, %v1705
        %v1722 = vadd.f32 %v1617, %v1710
        %v1723 = vadd.f32 %v1620, %v1713
        %v1724 = vlaneseq
        %v1725 = vshrl.u32 %v1724, 7
        %v1726 = vsub.s32 0, %v1725
        %v1727 = vrot.slane %v1436, %v1726
        %v1728 = vadd.f32 %v1716, %v1727
        %v1729 = vadd.f32 %v1717, %v1727
        %v1730 = vadd.f32 %v1718, %v1727
        %v1731 = vadd.f32 %v1719, %v1727
        %v1732 = vadd.f32 %v1720, %v1727
        %v1733 = vadd.f32 %v1721, %v1727
        %v1734 = vadd.f32 %v1722, %v1727
        %v1735 = vadd.f32 %v1723, %v1727
        %1736 = vmax.xlane.f32.xlu0 %v1728
        %v1737 = vpop.xlane.xlu0 %1736
        %1738 = vmax.xlane.f32.xlu0 %v1729
        %v1739 = vpop.xlane.xlu0 %1738
        %1740 = vmax.xlane.f32.xlu0 %v1730
        %v1741 = vpop.xlane.xlu0 %1740
        %1742 = vmax.xlane.f32.xlu0 %v1731
        %v1743 = vpop.xlane.xlu0 %1742
        %1744 = vmax.xlane.f32.xlu0 %v1732
        %v1745 = vpop.xlane.xlu0 %1744
        %1746 = vmax.xlane.f32.xlu0 %v1733
        %v1747 = vpop.xlane.xlu0 %1746
        %1748 = vmax.xlane.f32.xlu0 %v1734
        %v1749 = vpop.xlane.xlu0 %1748
        %1750 = vmax.xlane.f32.xlu0 %v1735
        %v1751 = vpop.xlane.xlu0 %1750
        %v1752 = vsub.f32 %v1728, %v1737
        %v1753 = vsub.f32 %v1729, %v1739
        %v1754 = vsub.f32 %v1730, %v1741
        %v1755 = vsub.f32 %v1731, %v1743
        %v1756 = vsub.f32 %v1732, %v1745
        %v1757 = vsub.f32 %v1733, %v1747
        %v1758 = vsub.f32 %v1734, %v1749
        %v1759 = vsub.f32 %v1735, %v1751
        %v1760 = vmul.f32 %v1752, 1.442695
        %v1761 = vpow.pop %v1760
        %v1762 = vmul.f32 %v1753, 1.442695
        %v1763 = vpow.pop %v1762
        %v1764 = vmul.f32 %v1754, 1.442695
        %v1765 = vpow.pop %v1764
        %v1766 = vmul.f32 %v1755, 1.442695
        %v1767 = vpow.pop %v1766
        %v1768 = vmul.f32 %v1756, 1.442695
        %v1769 = vpow.pop %v1768
        %v1770 = vmul.f32 %v1757, 1.442695
        %v1771 = vpow.pop %v1770
        %v1772 = vmul.f32 %v1758, 1.442695
        %v1773 = vpow.pop %v1772
        %v1774 = vmul.f32 %v1759, 1.442695
        %v1775 = vpow.pop %v1774
        %1776 = vadd.xlane.f32.xlu0 %v1761
        %v1777 = vpop.xlane.xlu0 %1776
        %1778 = vadd.xlane.f32.xlu0 %v1763
        %v1779 = vpop.xlane.xlu0 %1778
        %1780 = vadd.xlane.f32.xlu0 %v1765
        %v1781 = vpop.xlane.xlu0 %1780
        %1782 = vadd.xlane.f32.xlu0 %v1767
        %v1783 = vpop.xlane.xlu0 %1782
        %1784 = vadd.xlane.f32.xlu0 %v1769
        %v1785 = vpop.xlane.xlu0 %1784
        %1786 = vadd.xlane.f32.xlu0 %v1771
        %v1787 = vpop.xlane.xlu0 %1786
        %1788 = vadd.xlane.f32.xlu0 %v1773
        %v1789 = vpop.xlane.xlu0 %1788
        %1790 = vadd.xlane.f32.xlu0 %v1775
        %v1791 = vpop.xlane.xlu0 %1790
        %v1792 = vlog2.pop %v1777
        %v1793 = vmul.f32 %v1792, 0.6931472
        %v1794 = vlog2.pop %v1779
        %v1795 = vmul.f32 %v1794, 0.6931472
        %v1796 = vlog2.pop %v1781
        %v1797 = vmul.f32 %v1796, 0.6931472
        %v1798 = vlog2.pop %v1783
        %v1799 = vmul.f32 %v1798, 0.6931472
        %v1800 = vlog2.pop %v1785
        %v1801 = vmul.f32 %v1800, 0.6931472
        %v1802 = vlog2.pop %v1787
        %v1803 = vmul.f32 %v1802, 0.6931472
        %v1804 = vlog2.pop %v1789
        %v1805 = vmul.f32 %v1804, 0.6931472
        %v1806 = vlog2.pop %v1791
        %v1807 = vmul.f32 %v1806, 0.6931472
        %v1808 = vsub.f32 %v1752, %v1793
        %v1809 = vsub.f32 %v1753, %v1795
        %v1810 = vsub.f32 %v1754, %v1797
        %v1811 = vsub.f32 %v1755, %v1799
        %v1812 = vsub.f32 %v1756, %v1801
        %v1813 = vsub.f32 %v1757, %v1803
        %v1814 = vsub.f32 %v1758, %v1805
        %v1815 = vsub.f32 %v1759, %v1807
        %1816 = vst [vmem:[%s232] sm:$0xff] %v1808
        %1817 = vst [vmem:[%s232 + $0x8] sm:$0xff] %v1809
        %1818 = vst [vmem:[%s232 + $0x10] sm:$0xff] %v1810
        %1819 = vst [vmem:[%s232 + $0x18] sm:$0xff] %v1811
        %1820 = vst [vmem:[%s232 + $0x20] sm:$0xff] %v1812
        %1821 = vst [vmem:[%s232 + $0x28] sm:$0xff] %v1813
        %1822 = vst [vmem:[%s232 + $0x30] sm:$0xff] %v1814
        %1823 = vst [vmem:[%s232 + $0x38] sm:$0xff] %v1815
        %s1824 = sand.u32 %s142, 1
        %s1825 = scalar_lea.sflag [#allocation3], %s1824
        %s1826 = sand.u32 %s142, 1
        %s1827 = smul.addr %s1826, 64
        %s1828 = scalar_lea.vmem [#allocation2], %s1827
        // Predicated region
        $region41: #{tpu_custom_call.1} parent=39 // pred_check
          %p1829 = pneg %p152
        $region42: #{tpu_custom_call.1} parent=39 // pred_check_branch
          %1831 = sbr.rel (%p1829) target = $region44
        $region43: #{tpu_custom_call.1} parent=39 // pred_region
          %s1833 = ssub.s32 1024, 1024
          %1834 = vsyncadd %s1825, %s1833
          %s1835 = smul.addr %s19, 8
          %s1836 = smul.addr %s1835, 128
          %s1837 = scalar_lea.hbm %s5, %s1836
          %s1838 = sshll.u32 %s1828, 4
          %s1839 = int_to_ptr.vmem [resolvable:$true] %s1838
          %1844 = dma.vmem_to_hbm [thread:$0]  %s1839, 1024, %s1837, %s1825, 128, 128, 8
        $region44: #{tpu_custom_call.1} parent=39 // pred_fallthru
          _
      $region40: #{tpu_custom_call.1} parent=5 // pred_fallthru
        _
      %p1845 = scmp.le.s32.totalorder 2, %s14
      // Predicated region
      $region45: #{tpu_custom_call.1} parent=5 // pred_check
        %p1846 = pneg %p1845
      $region46: #{tpu_custom_call.1} parent=5 // pred_check_branch
        %1848 = sbr.rel (%p1846) target = $region48
      $region47: #{tpu_custom_call.1} parent=5 // pred_region
        %s1849 = ssub.s32 %s14, 2
        // Predicated region
        $region49: #{tpu_custom_call.1} parent=47 // pred_check
          %p1850 = pneg %p158
        $region50: #{tpu_custom_call.1} parent=47 // pred_check_branch
          %1852 = sbr.rel (%p1850) target = $region52
        $region51: #{tpu_custom_call.1} parent=47 // pred_region
          %s1853 = sand.u32 %s143, 1
          %s1854 = scalar_lea.sflag [#allocation3], %s1853
          %s1855 = sand.u32 %s143, 1
          %s1856 = smul.addr %s1855, 64
          %s1857 = scalar_lea.vmem [#allocation2], %s1856
          %1858 = dma.done %s1854, 1024
        $region52: #{tpu_custom_call.1} parent=47 // pred_fallthru
          _
      $region48: #{tpu_custom_call.1} parent=5 // pred_fallthru
        _
    $region6: #{tpu_custom_call.1} parent=1 // loop_footer
      %s18 = sadd.s32 1, %s14
    $region7: #{tpu_custom_call.1} parent=1 // loop_footer_branch
      %13 = sbr.rel target = $region3
    $region8: #{tpu_custom_call.1} parent=1 // loop_exit
      _
    %1859 = vsyncpa [#allocation3], 1
    %s1860 = scalar_lea.sflag [#allocation3], 1
    %1861 = vsyncpa %s1860, 1

</llo_original>
